<compile_context>
chip_gen: v7x
topology: tpu7x:2x2x1
jax: 0.10.0
libtpu: 0.0.40
codegen_flags: <defaults>
</compile_context>

<pallas_src>
import functools
import math

import jax
import jax.numpy as jnp
from jax import lax
from jax.experimental import pallas as pl
from jax.experimental.pallas import tpu as pltpu


# ------------------------------ fused kernel --------------------------------

def _mha_kernel(xq_ref, xk_ref, xv_ref, wq_ref, wk_ref, wv_ref, wo_ref, o_ref,
                *, num_heads, head_dim):
    """One grid step == one batch element.

    xq_ref: (Sq, Dq)   xk_ref: (Sk, Dk)   xv_ref: (Sk, Dv)
    wq/wk/wv: (D*, H)  wo_ref: (H, H_pad) o_ref: (Sq, H_pad)
    """
    f32 = jnp.float32
    scale = 1.0 / math.sqrt(head_dim)

    # Projections on the MXU; 1/sqrt(head_dim) folded into Q once.
    q = jnp.dot(xq_ref[...], wq_ref[...], preferred_element_type=f32) * scale
    k = jnp.dot(xk_ref[...], wk_ref[...], preferred_element_type=f32)
    v = jnp.dot(xv_ref[...], wv_ref[...], preferred_element_type=f32)

    acc = jnp.zeros(o_ref.shape, f32)  # (Sq, H_pad) output accumulator
    for h in range(num_heads):         # static unroll over heads
        lo = h * head_dim
        hi = lo + head_dim
        qh = q[:, lo:hi]               # (Sq, hd), scale already applied
        kh = k[:, lo:hi]               # (Sk, hd)
        vh = v[:, lo:hi]               # (Sk, hd)

        # Scores: contract last dims directly (no kh.T / XLU transpose).
        s = lax.dot_general(qh, kh, (((1,), (1,)), ((), ())),
                            preferred_element_type=f32)            # (Sq, Sk)
        m = jnp.max(s, axis=-1, keepdims=True)
        e = jnp.exp(s - m)
        p = e * pl.reciprocal(jnp.sum(e, axis=-1, keepdims=True), approx=True)

        oh = jnp.dot(p, vh, preferred_element_type=f32)             # (Sq, hd)
        # Fold output projection per head (replaces head/batch concats):
        #   concat_h(o_h) @ W_o == sum_h o_h @ W_o[h*hd:(h+1)*hd, :]
        acc = acc + jnp.dot(oh, wo_ref[lo:hi, :], preferred_element_type=f32)

    o_ref[...] = acc.astype(o_ref.dtype)   # lane-dense (H_pad = multiple of 128)


# ----------------------------- module forward -------------------------------

def multihead_attention(queries, keys, values, params, num_heads):
    """queries: (B, Sq, query_size), keys: (B, Sk, key_size),
    values: (B, Sk, value_size) -> (B, Sq, num_hiddens)."""
    B, Sq, Dq = queries.shape
    _, Sk, Dk = keys.shape
    _, _, Dv = values.shape
    H = params["W_q"].shape[1]
    head_dim = H // num_heads
    H_pad = ((H + 127) // 128) * 128      # lane-dense output store

    wo_pad = params["W_o"]
    if H_pad != H:
        wo_pad = jnp.pad(wo_pad, ((0, 0), (0, H_pad - H)))

    kernel = functools.partial(_mha_kernel, num_heads=num_heads, head_dim=head_dim)

    vmem = pltpu.MemorySpace.VMEM

    def act_spec(S, D):
        return pl.BlockSpec((None, S, D), lambda b: (b, 0, 0), memory_space=vmem)

    def w_spec(r, c):
        # Constant index_map: weights stay VMEM-resident across grid steps.
        return pl.BlockSpec((r, c), lambda b: (0, 0), memory_space=vmem)

    out = pl.pallas_call(
        kernel,
        out_shape=jax.ShapeDtypeStruct((B, Sq, H_pad), jnp.float32),
        grid=(B,),
        in_specs=[act_spec(Sq, Dq), act_spec(Sk, Dk), act_spec(Sk, Dv),
                  w_spec(Dq, H), w_spec(Dk, H), w_spec(Dv, H),
                  w_spec(H, H_pad)],
        out_specs=pl.BlockSpec((None, Sq, H_pad), lambda b: (b, 0, 0),
                               memory_space=vmem),
        compiler_params=pltpu.CompilerParams(
            dimension_semantics=("parallel",)),   # batch shards across TCs (v7x)
    )(queries, keys, values,
      params["W_q"], params["W_k"], params["W_v"], wo_pad)

    return out[..., :H]


# ------------------------------ pure-JAX ref ---------------------------------

def _transpose_qkv(x, num_heads):
    B, S, H = x.shape
    x = x.reshape(B, S, num_heads, H // num_heads)
    x = jnp.transpose(x, (0, 2, 1, 3))
    return x.reshape(B * num_heads, S, H // num_heads)


def _transpose_output(x, num_heads):
    BH, S, hd = x.shape
    B = BH // num_heads
    x = x.reshape(B, num_heads, S, hd)
    x = jnp.transpose(x, (0, 2, 1, 3))
    return x.reshape(B, S, num_heads * hd)


def _ref_forward(queries, keys, values, params, num_heads):
    q = queries @ params["W_q"]
    k = keys @ params["W_k"]
    v = values @ params["W_v"]
    qh = _transpose_qkv(q, num_heads)
    kh = _transpose_qkv(k, num_heads)
    vh = _transpose_qkv(v, num_heads)
    d = qh.shape[-1]
    scores = jnp.einsum("bqd,bkd->bqk", qh, kh) / jnp.sqrt(jnp.float32(d))
    w = jax.nn.softmax(scores, axis=-1)
    oh = jnp.einsum("bqk,bkd->bqd", w, vh)
    oc = _transpose_output(oh, num_heads)
    return oc @ params["W_o"]


# ---------------------------------- main -------------------------------------

if __name__ == "__main__":
    # MultiHead_Attention(key_size=32, query_size=32, value_size=32,
    #                     num_hiddens=32, num_heads=4, dropout=0.0, bias=False)
    key_size = query_size = value_size = 32
    num_hiddens = 32
    num_heads = 4
    B, Sq, Sk = 2, 8, 8

    root = jax.random.PRNGKey(0)
    kq, kk, kv, ko, kx1, kx2, kx3 = jax.random.split(root, 7)

    scale = 0.05
    params = {
        "W_q": scale * jax.random.normal(kq, (query_size, num_hiddens), jnp.float32),
        "W_k": scale * jax.random.normal(kk, (key_size, num_hiddens), jnp.float32),
        "W_v": scale * jax.random.normal(kv, (value_size, num_hiddens), jnp.float32),
        "W_o": scale * jax.random.normal(ko, (num_hiddens, num_hiddens), jnp.float32),
    }

    queries = jax.random.normal(kx1, (B, Sq, query_size), jnp.float32)
    keys = jax.random.normal(kx2, (B, Sk, key_size), jnp.float32)
    values = jax.random.normal(kx3, (B, Sk, value_size), jnp.float32)

    out = multihead_attention(queries, keys, values, params, num_heads)
    out = jax.block_until_ready(out)

    ref = _ref_forward(queries, keys, values, params, num_heads)
    assert out.shape == (B, Sq, num_hiddens), out.shape
    # Slightly looser tolerance than 1e-4 because of the approx (EUP) reciprocal.
    assert jnp.allclose(out, ref, atol=2e-3, rtol=2e-3), "mismatch vs reference"

    print("KERNEL_OK")
</pallas_src>

<mosaic_0001>
module attributes {stable_mosaic.version = 11 : i64} {
  func.func @_mha_kernel(%arg0: i32, %arg1: memref<1x8x32xf32, #tpu.memory_space<vmem>>, %arg2: memref<1x8x32xf32, #tpu.memory_space<vmem>>, %arg3: memref<1x8x32xf32, #tpu.memory_space<vmem>>, %arg4: memref<32x32xf32, #tpu.memory_space<vmem>>, %arg5: memref<32x32xf32, #tpu.memory_space<vmem>>, %arg6: memref<32x32xf32, #tpu.memory_space<vmem>>, %arg7: memref<32x128xf32, #tpu.memory_space<vmem>>, %arg8: memref<1x8x128xf32, #tpu.memory_space<vmem>>) attributes {dimension_semantics = [#tpu.dimension_semantics<parallel>], iteration_bounds = array<i64: 2>, scalar_prefetch = 0 : i64, scratch_operands = 0 : i64, tpu.core_type = #tpu.core_type<tc>, window_params = [{transform_indices = @transform_0, window_bounds = array<i64: 1, 8, 32>}, {transform_indices = @transform_1, window_bounds = array<i64: 1, 8, 32>}, {transform_indices = @transform_2, window_bounds = array<i64: 1, 8, 32>}, {pipeline_mode = #tpu.pipeline_mode<synchronous>, transform_indices = @transform_3, window_bounds = array<i64: 32, 32>}, {pipeline_mode = #tpu.pipeline_mode<synchronous>, transform_indices = @transform_4, window_bounds = array<i64: 32, 32>}, {pipeline_mode = #tpu.pipeline_mode<synchronous>, transform_indices = @transform_5, window_bounds = array<i64: 32, 32>}, {pipeline_mode = #tpu.pipeline_mode<synchronous>, transform_indices = @transform_6, window_bounds = array<i64: 32, 128>}, {transform_indices = @transform_7, window_bounds = array<i64: 1, 8, 128>}]} {
    %c0 = arith.constant 0 : index
    %c0_0 = arith.constant 0 : index
    %c0_1 = arith.constant 0 : index
    %0 = vector.load %arg1[%c0, %c0_0, %c0_1] : memref<1x8x32xf32, #tpu.memory_space<vmem>>, vector<1x8x32xf32>
    %1 = vector.shape_cast %0 : vector<1x8x32xf32> to vector<8x32xf32>
    %c0_2 = arith.constant 0 : index
    %c0_3 = arith.constant 0 : index
    %2 = vector.load %arg4[%c0_2, %c0_3] : memref<32x32xf32, #tpu.memory_space<vmem>>, vector<32x32xf32>
    %cst = arith.constant dense<0.000000e+00> : vector<8x32xf32>
    %3 = tpu.matmul %1, %2, %cst {dimension_numbers = #tpu.dot_dimension_numbers<[1], [0], [0], [1], [0, 0, 1, 1], [], []>} : vector<8x32xf32>, vector<32x32xf32>, vector<8x32xf32> -> vector<8x32xf32>
    %cst_4 = arith.constant 0.353553385 : f32
    %4 = vector.broadcast %cst_4 : f32 to vector<8x32xf32>
    %5 = arith.mulf %3, %4 : vector<8x32xf32>
    %c0_5 = arith.constant 0 : index
    %c0_6 = arith.constant 0 : index
    %c0_7 = arith.constant 0 : index
    %6 = vector.load %arg2[%c0_5, %c0_6, %c0_7] : memref<1x8x32xf32, #tpu.memory_space<vmem>>, vector<1x8x32xf32>
    %7 = vector.shape_cast %6 : vector<1x8x32xf32> to vector<8x32xf32>
    %c0_8 = arith.constant 0 : index
    %c0_9 = arith.constant 0 : index
    %8 = vector.load %arg5[%c0_8, %c0_9] : memref<32x32xf32, #tpu.memory_space<vmem>>, vector<32x32xf32>
    %cst_10 = arith.constant dense<0.000000e+00> : vector<8x32xf32>
    %9 = tpu.matmul %7, %8, %cst_10 {dimension_numbers = #tpu.dot_dimension_numbers<[1], [0], [0], [1], [0, 0, 1, 1], [], []>} : vector<8x32xf32>, vector<32x32xf32>, vector<8x32xf32> -> vector<8x32xf32>
    %c0_11 = arith.constant 0 : index
    %c0_12 = arith.constant 0 : index
    %c0_13 = arith.constant 0 : index
    %10 = vector.load %arg3[%c0_11, %c0_12, %c0_13] : memref<1x8x32xf32, #tpu.memory_space<vmem>>, vector<1x8x32xf32>
    %11 = vector.shape_cast %10 : vector<1x8x32xf32> to vector<8x32xf32>
    %c0_14 = arith.constant 0 : index
    %c0_15 = arith.constant 0 : index
    %12 = vector.load %arg6[%c0_14, %c0_15] : memref<32x32xf32, #tpu.memory_space<vmem>>, vector<32x32xf32>
    %cst_16 = arith.constant dense<0.000000e+00> : vector<8x32xf32>
    %13 = tpu.matmul %11, %12, %cst_16 {dimension_numbers = #tpu.dot_dimension_numbers<[1], [0], [0], [1], [0, 0, 1, 1], [], []>} : vector<8x32xf32>, vector<32x32xf32>, vector<8x32xf32> -> vector<8x32xf32>
    %cst_17 = arith.constant 0.000000e+00 : f32
    %14 = vector.broadcast %cst_17 : f32 to vector<8x128xf32>
    %15 = vector.extract_strided_slice %5 {offsets = [0, 0], sizes = [8, 8], strides = [1, 1]} : vector<8x32xf32> to vector<8x8xf32>
    %16 = vector.extract_strided_slice %9 {offsets = [0, 0], sizes = [8, 8], strides = [1, 1]} : vector<8x32xf32> to vector<8x8xf32>
    %17 = vector.extract_strided_slice %13 {offsets = [0, 0], sizes = [8, 8], strides = [1, 1]} : vector<8x32xf32> to vector<8x8xf32>
    %cst_18 = arith.constant dense<0.000000e+00> : vector<8x8xf32>
    %18 = tpu.matmul %15, %16, %cst_18 {dimension_numbers = #tpu.dot_dimension_numbers<[1], [1], [0], [0], [0, 0, 1, 0], [], []>} : vector<8x8xf32>, vector<8x8xf32>, vector<8x8xf32> -> vector<8x8xf32>
    %cst_19 = arith.constant dense<0xFF800000> : vector<8xf32>
    %19 = vector.multi_reduction <maximumf>, %18, %cst_19 [1] : vector<8x8xf32> to vector<8xf32>
    %20 = vector.shape_cast %19 : vector<8xf32> to vector<8x1xf32>
    %21 = vector.broadcast %20 : vector<8x1xf32> to vector<8x8xf32>
    %22 = arith.subf %18, %21 : vector<8x8xf32>
    %23 = math.exp %22 : vector<8x8xf32>
    %cst_20 = arith.constant dense<0.000000e+00> : vector<8xf32>
    %24 = vector.multi_reduction <add>, %23, %cst_20 [1] : vector<8x8xf32> to vector<8xf32>
    %25 = vector.shape_cast %24 : vector<8xf32> to vector<8x1xf32>
    %26 = tpu.reciprocal %25 {approx = true} : vector<8x1xf32> -> vector<8x1xf32>
    %27 = vector.broadcast %26 : vector<8x1xf32> to vector<8x8xf32>
    %28 = arith.mulf %23, %27 : vector<8x8xf32>
    %cst_21 = arith.constant dense<0.000000e+00> : vector<8x8xf32>
    %29 = tpu.matmul %28, %17, %cst_21 {dimension_numbers = #tpu.dot_dimension_numbers<[1], [0], [0], [1], [0, 0, 1, 1], [], []>} : vector<8x8xf32>, vector<8x8xf32>, vector<8x8xf32> -> vector<8x8xf32>
    %c0_22 = arith.constant 0 : index
    %c0_23 = arith.constant 0 : index
    %30 = vector.load %arg7[%c0_22, %c0_23] : memref<32x128xf32, #tpu.memory_space<vmem>>, vector<8x128xf32>
    %cst_24 = arith.constant dense<0.000000e+00> : vector<8x128xf32>
    %31 = tpu.matmul %29, %30, %cst_24 {dimension_numbers = #tpu.dot_dimension_numbers<[1], [0], [0], [1], [0, 0, 1, 1], [], []>} : vector<8x8xf32>, vector<8x128xf32>, vector<8x128xf32> -> vector<8x128xf32>
    %32 = arith.addf %14, %31 : vector<8x128xf32>
    %33 = vector.extract_strided_slice %5 {offsets = [0, 8], sizes = [8, 8], strides = [1, 1]} : vector<8x32xf32> to vector<8x8xf32>
    %34 = vector.extract_strided_slice %9 {offsets = [0, 8], sizes = [8, 8], strides = [1, 1]} : vector<8x32xf32> to vector<8x8xf32>
    %35 = vector.extract_strided_slice %13 {offsets = [0, 8], sizes = [8, 8], strides = [1, 1]} : vector<8x32xf32> to vector<8x8xf32>
    %cst_25 = arith.constant dense<0.000000e+00> : vector<8x8xf32>
    %36 = tpu.matmul %33, %34, %cst_25 {dimension_numbers = #tpu.dot_dimension_numbers<[1], [1], [0], [0], [0, 0, 1, 0], [], []>} : vector<8x8xf32>, vector<8x8xf32>, vector<8x8xf32> -> vector<8x8xf32>
    %cst_26 = arith.constant dense<0xFF800000> : vector<8xf32>
    %37 = vector.multi_reduction <maximumf>, %36, %cst_26 [1] : vector<8x8xf32> to vector<8xf32>
    %38 = vector.shape_cast %37 : vector<8xf32> to vector<8x1xf32>
    %39 = vector.broadcast %38 : vector<8x1xf32> to vector<8x8xf32>
    %40 = arith.subf %36, %39 : vector<8x8xf32>
    %41 = math.exp %40 : vector<8x8xf32>
    %cst_27 = arith.constant dense<0.000000e+00> : vector<8xf32>
    %42 = vector.multi_reduction <add>, %41, %cst_27 [1] : vector<8x8xf32> to vector<8xf32>
    %43 = vector.shape_cast %42 : vector<8xf32> to vector<8x1xf32>
    %44 = tpu.reciprocal %43 {approx = true} : vector<8x1xf32> -> vector<8x1xf32>
    %45 = vector.broadcast %44 : vector<8x1xf32> to vector<8x8xf32>
    %46 = arith.mulf %41, %45 : vector<8x8xf32>
    %cst_28 = arith.constant dense<0.000000e+00> : vector<8x8xf32>
    %47 = tpu.matmul %46, %35, %cst_28 {dimension_numbers = #tpu.dot_dimension_numbers<[1], [0], [0], [1], [0, 0, 1, 1], [], []>} : vector<8x8xf32>, vector<8x8xf32>, vector<8x8xf32> -> vector<8x8xf32>
    %c8 = arith.constant 8 : index
    %c0_29 = arith.constant 0 : index
    %48 = vector.load %arg7[%c8, %c0_29] : memref<32x128xf32, #tpu.memory_space<vmem>>, vector<8x128xf32>
    %cst_30 = arith.constant dense<0.000000e+00> : vector<8x128xf32>
    %49 = tpu.matmul %47, %48, %cst_30 {dimension_numbers = #tpu.dot_dimension_numbers<[1], [0], [0], [1], [0, 0, 1, 1], [], []>} : vector<8x8xf32>, vector<8x128xf32>, vector<8x128xf32> -> vector<8x128xf32>
    %50 = arith.addf %32, %49 : vector<8x128xf32>
    %51 = vector.extract_strided_slice %5 {offsets = [0, 16], sizes = [8, 8], strides = [1, 1]} : vector<8x32xf32> to vector<8x8xf32>
    %52 = vector.extract_strided_slice %9 {offsets = [0, 16], sizes = [8, 8], strides = [1, 1]} : vector<8x32xf32> to vector<8x8xf32>
    %53 = vector.extract_strided_slice %13 {offsets = [0, 16], sizes = [8, 8], strides = [1, 1]} : vector<8x32xf32> to vector<8x8xf32>
    %cst_31 = arith.constant dense<0.000000e+00> : vector<8x8xf32>
    %54 = tpu.matmul %51, %52, %cst_31 {dimension_numbers = #tpu.dot_dimension_numbers<[1], [1], [0], [0], [0, 0, 1, 0], [], []>} : vector<8x8xf32>, vector<8x8xf32>, vector<8x8xf32> -> vector<8x8xf32>
    %cst_32 = arith.constant dense<0xFF800000> : vector<8xf32>
    %55 = vector.multi_reduction <maximumf>, %54, %cst_32 [1] : vector<8x8xf32> to vector<8xf32>
    %56 = vector.shape_cast %55 : vector<8xf32> to vector<8x1xf32>
    %57 = vector.broadcast %56 : vector<8x1xf32> to vector<8x8xf32>
    %58 = arith.subf %54, %57 : vector<8x8xf32>
    %59 = math.exp %58 : vector<8x8xf32>
    %cst_33 = arith.constant dense<0.000000e+00> : vector<8xf32>
    %60 = vector.multi_reduction <add>, %59, %cst_33 [1] : vector<8x8xf32> to vector<8xf32>
    %61 = vector.shape_cast %60 : vector<8xf32> to vector<8x1xf32>
    %62 = tpu.reciprocal %61 {approx = true} : vector<8x1xf32> -> vector<8x1xf32>
    %63 = vector.broadcast %62 : vector<8x1xf32> to vector<8x8xf32>
    %64 = arith.mulf %59, %63 : vector<8x8xf32>
    %cst_34 = arith.constant dense<0.000000e+00> : vector<8x8xf32>
    %65 = tpu.matmul %64, %53, %cst_34 {dimension_numbers = #tpu.dot_dimension_numbers<[1], [0], [0], [1], [0, 0, 1, 1], [], []>} : vector<8x8xf32>, vector<8x8xf32>, vector<8x8xf32> -> vector<8x8xf32>
    %c16 = arith.constant 16 : index
    %c0_35 = arith.constant 0 : index
    %66 = vector.load %arg7[%c16, %c0_35] : memref<32x128xf32, #tpu.memory_space<vmem>>, vector<8x128xf32>
    %cst_36 = arith.constant dense<0.000000e+00> : vector<8x128xf32>
    %67 = tpu.matmul %65, %66, %cst_36 {dimension_numbers = #tpu.dot_dimension_numbers<[1], [0], [0], [1], [0, 0, 1, 1], [], []>} : vector<8x8xf32>, vector<8x128xf32>, vector<8x128xf32> -> vector<8x128xf32>
    %68 = arith.addf %50, %67 : vector<8x128xf32>
    %69 = vector.extract_strided_slice %5 {offsets = [0, 24], sizes = [8, 8], strides = [1, 1]} : vector<8x32xf32> to vector<8x8xf32>
    %70 = vector.extract_strided_slice %9 {offsets = [0, 24], sizes = [8, 8], strides = [1, 1]} : vector<8x32xf32> to vector<8x8xf32>
    %71 = vector.extract_strided_slice %13 {offsets = [0, 24], sizes = [8, 8], strides = [1, 1]} : vector<8x32xf32> to vector<8x8xf32>
    %cst_37 = arith.constant dense<0.000000e+00> : vector<8x8xf32>
    %72 = tpu.matmul %69, %70, %cst_37 {dimension_numbers = #tpu.dot_dimension_numbers<[1], [1], [0], [0], [0, 0, 1, 0], [], []>} : vector<8x8xf32>, vector<8x8xf32>, vector<8x8xf32> -> vector<8x8xf32>
    %cst_38 = arith.constant dense<0xFF800000> : vector<8xf32>
    %73 = vector.multi_reduction <maximumf>, %72, %cst_38 [1] : vector<8x8xf32> to vector<8xf32>
    %74 = vector.shape_cast %73 : vector<8xf32> to vector<8x1xf32>
    %75 = vector.broadcast %74 : vector<8x1xf32> to vector<8x8xf32>
    %76 = arith.subf %72, %75 : vector<8x8xf32>
    %77 = math.exp %76 : vector<8x8xf32>
    %cst_39 = arith.constant dense<0.000000e+00> : vector<8xf32>
    %78 = vector.multi_reduction <add>, %77, %cst_39 [1] : vector<8x8xf32> to vector<8xf32>
    %79 = vector.shape_cast %78 : vector<8xf32> to vector<8x1xf32>
    %80 = tpu.reciprocal %79 {approx = true} : vector<8x1xf32> -> vector<8x1xf32>
    %81 = vector.broadcast %80 : vector<8x1xf32> to vector<8x8xf32>
    %82 = arith.mulf %77, %81 : vector<8x8xf32>
    %cst_40 = arith.constant dense<0.000000e+00> : vector<8x8xf32>
    %83 = tpu.matmul %82, %71, %cst_40 {dimension_numbers = #tpu.dot_dimension_numbers<[1], [0], [0], [1], [0, 0, 1, 1], [], []>} : vector<8x8xf32>, vector<8x8xf32>, vector<8x8xf32> -> vector<8x8xf32>
    %c24 = arith.constant 24 : index
    %c0_41 = arith.constant 0 : index
    %84 = vector.load %arg7[%c24, %c0_41] : memref<32x128xf32, #tpu.memory_space<vmem>>, vector<8x128xf32>
    %cst_42 = arith.constant dense<0.000000e+00> : vector<8x128xf32>
    %85 = tpu.matmul %83, %84, %cst_42 {dimension_numbers = #tpu.dot_dimension_numbers<[1], [0], [0], [1], [0, 0, 1, 1], [], []>} : vector<8x8xf32>, vector<8x128xf32>, vector<8x128xf32> -> vector<8x128xf32>
    %86 = arith.addf %68, %85 : vector<8x128xf32>
    %c0_43 = arith.constant 0 : index
    %c0_44 = arith.constant 0 : index
    %c0_45 = arith.constant 0 : index
    %87 = vector.load %arg8[%c0_43, %c0_44, %c0_45] : memref<1x8x128xf32, #tpu.memory_space<vmem>>, vector<1x8x128xf32>
    %88 = vector.shape_cast %87 : vector<1x8x128xf32> to vector<8x128xf32>
    %89 = vector.shape_cast %86 : vector<8x128xf32> to vector<1x8x128xf32>
    tpu.vector_store %arg8[%c0_43, %c0_44, %c0_45], %89 {strides = array<i32>} : memref<1x8x128xf32, #tpu.memory_space<vmem>>, vector<1x8x128xf32>,
    return
  }
  func.func @transform_0(%arg0: i32) -> (i32, i32, i32) {
    %c0_i32 = arith.constant 0 : i32
    %c0_i32_0 = arith.constant 0 : i32
    %c0_i32_1 = arith.constant 0 : i32
    return %arg0, %c0_i32, %c0_i32_0 : i32, i32, i32
  }
  func.func @transform_1(%arg0: i32) -> (i32, i32, i32) {
    %c0_i32 = arith.constant 0 : i32
    %c0_i32_0 = arith.constant 0 : i32
    %c0_i32_1 = arith.constant 0 : i32
    return %arg0, %c0_i32, %c0_i32_0 : i32, i32, i32
  }
  func.func @transform_2(%arg0: i32) -> (i32, i32, i32) {
    %c0_i32 = arith.constant 0 : i32
    %c0_i32_0 = arith.constant 0 : i32
    %c0_i32_1 = arith.constant 0 : i32
    return %arg0, %c0_i32, %c0_i32_0 : i32, i32, i32
  }
  func.func @transform_3(%arg0: i32) -> (i32, i32) {
    %c0_i32 = arith.constant 0 : i32
    %c0_i32_0 = arith.constant 0 : i32
    %c0_i32_1 = arith.constant 0 : i32
    return %c0_i32, %c0_i32_0 : i32, i32
  }
  func.func @transform_4(%arg0: i32) -> (i32, i32) {
    %c0_i32 = arith.constant 0 : i32
    %c0_i32_0 = arith.constant 0 : i32
    %c0_i32_1 = arith.constant 0 : i32
    return %c0_i32, %c0_i32_0 : i32, i32
  }
  func.func @transform_5(%arg0: i32) -> (i32, i32) {
    %c0_i32 = arith.constant 0 : i32
    %c0_i32_0 = arith.constant 0 : i32
    %c0_i32_1 = arith.constant 0 : i32
    return %c0_i32, %c0_i32_0 : i32, i32
  }
  func.func @transform_6(%arg0: i32) -> (i32, i32) {
    %c0_i32 = arith.constant 0 : i32
    %c0_i32_0 = arith.constant 0 : i32
    %c0_i32_1 = arith.constant 0 : i32
    return %c0_i32, %c0_i32_0 : i32, i32
  }
  func.func @transform_7(%arg0: i32) -> (i32, i32, i32) {
    %c0_i32 = arith.constant 0 : i32
    %c0_i32_0 = arith.constant 0 : i32
    %c0_i32_1 = arith.constant 0 : i32
    return %arg0, %c0_i32, %c0_i32_0 : i32, i32, i32
  }
}

</mosaic_0001>

<llo_original>
// kernel: tpu_custom_call.1
$region0: #{tpu_custom_call.1}
  #allocation0 [shape = 'u32[]', space=smem, size = 0x4, offset = 0x4, fixed_abs, tag = 'smem constant byte address 0x4 - core index']
  #allocation1 [shape = 'u32[144,128]{1,0:T(1,128)}', space=vmem, size = 0x12000, scoped, tag = 'internal scratch']
  %s0 = inlined_call_operand.hbm [shape: f32[2,8,32], index: 0, kind: input, shape index: {}]
  %s1 = inlined_call_operand.hbm [shape: f32[2,8,32], index: 1, kind: input, shape index: {}]
  %s2 = inlined_call_operand.hbm [shape: f32[2,8,32], index: 2, kind: input, shape index: {}]
  %s3 = inlined_call_operand.hbm [shape: f32[32,32], index: 3, kind: input, shape index: {}]
  %s4 = inlined_call_operand.hbm [shape: f32[32,32], index: 4, kind: input, shape index: {}]
  %s5 = inlined_call_operand.hbm [shape: f32[32,32], index: 5, kind: input, shape index: {}]
  %s6 = inlined_call_operand.hbm [shape: f32[32,128], index: 6, kind: input, shape index: {}]
  %s7 = inlined_call_operand.hbm [shape: f32[2,8,128], index: 7, kind: output, shape index: {}]
  %s8 = sld [smem:[#allocation0]]
  $region89: #{tpu_custom_call.1} parent=0
    _
  %s10 = ssub.s32 1, %s8
  %s11 = scalar_select 0, %s10, %s8
  $region1: #{tpu_custom_call.1} parent=0
    #allocation2 [shape = 'u8[8192]{0}', space=vmem, size = 0x2000, scoped, tag = 'input window, operand 0']
    #allocation3 [shape = 's32[2]{0}', space=sflag, size = 0x8, scoped, tag = 'scoped memory for tpu_custom_call.1']
    #allocation4 [shape = 's32[2]{0}', space=sflag, size = 0x8, scoped, tag = 'scoped memory for tpu_custom_call.1']
    #allocation5 [shape = 'u8[8192]{0}', space=vmem, size = 0x2000, scoped, tag = 'input window, operand 1']
    #allocation6 [shape = 's32[2]{0}', space=sflag, size = 0x8, scoped, tag = 'scoped memory for tpu_custom_call.1']
    #allocation7 [shape = 'u8[8192]{0}', space=vmem, size = 0x2000, scoped, tag = 'input window, operand 2']
    #allocation8 [shape = 'u8[16384]{0}', space=vmem, size = 0x4000, scoped, tag = 'input window, operand 3, single buffered']
    #allocation9 [shape = 's32[1]{0}', space=sflag, size = 0x4, scoped, tag = 'scoped memory for tpu_custom_call.1']
    #allocation10 [shape = 'u8[16384]{0}', space=vmem, size = 0x4000, scoped, tag = 'input window, operand 4, single buffered']
    #allocation11 [shape = 'u8[16384]{0}', space=vmem, size = 0x4000, scoped, tag = 'input window, operand 5, single buffered']
    #allocation12 [shape = 's32[1]{0}', space=sflag, size = 0x4, scoped, tag = 'scoped memory for tpu_custom_call.1']
    #allocation13 [shape = 'u8[16384]{0}', space=vmem, size = 0x4000, scoped, tag = 'input window, operand 6, single buffered']
    #allocation14 [shape = 'u8[8192]{0}', space=vmem, size = 0x2000, scoped, tag = 'output window, operand 0']
    %12 = vsyncpa [#allocation3], 0
    %s13 = scalar_lea.sflag [#allocation3], 1
    %14 = vsyncpa %s13, 0
    %15 = vsyncpa [#allocation6], 0
    %s16 = scalar_lea.sflag [#allocation6], 1
    %17 = vsyncpa %s16, 0
    %18 = vsyncpa [#allocation9], 0
    %19 = vsyncpa [#allocation12], 0
    %20 = vsyncpa [#allocation4], 0
    %s21 = scalar_lea.sflag [#allocation4], 1
    %22 = vsyncpa %s21, 0
    loop: start=0, step=1, limit=4
    $region2: #{tpu_custom_call.1} parent=1 // loop_pre_header
      _
    $region3: #{tpu_custom_call.1} parent=1 // loop_header
      %s24 = sphi 0, %s28
      %p25 = scmp.ge.s32.totalorder %s24, 4
      %s34 = sphi 0, %s36
      %s37 = sphi 0, %s34
      %s38 = sphi 0, %s37
      %s54 = sphi 0, %s38
      %s60 = sphi 0, %s62
      %s63 = sphi 0, %s60
      %s64 = sphi 0, %s63
      %s80 = sphi 0, %s64
      %s86 = sphi 0, %s88
      %s89 = sphi 0, %s86
      %s90 = sphi 0, %s89
      %s106 = sphi 0, %s90
      %s110 = sphi 0, %s110
      %s112 = sphi 0, %s110
      %s113 = sphi 0, %s112
      %s127 = sphi 0, %s113
      %s131 = sphi 0, %s131
      %s133 = sphi 0, %s131
      %s134 = sphi 0, %s133
      %s148 = sphi 0, %s134
      %s152 = sphi 0, %s152
      %s154 = sphi 0, %s152
      %s155 = sphi 0, %s154
      %s169 = sphi 0, %s155
      %s173 = sphi 0, %s173
      %s175 = sphi 0, %s173
      %s176 = sphi 0, %s175
      %s190 = sphi 0, %s176
      %s196 = sphi 0, %s198
      %s199 = sphi 0, %s196
      %s200 = sphi 0, %s199
      %s216 = sphi 0, %s200
    $region4: #{tpu_custom_call.1} parent=1 // loop_header_branch
      %27 = sbr.rel (%p25) target = $region8
    $region5: #{tpu_custom_call.1} parent=1 // loop_body
      %s29 = ssub.s32 %s24, 1
      %s30 = ssub.s32 %s24, 2
      %s31 = sadd.s32 %s24, 1
      %s32 = ssub.s32 %s24, %s31
      %p33 = scmp.eq.s32.totalorder %s32, 0
      %s35 = sadd.s32 %s34, 1
      %s36 = scalar_select %p33, %s34, %s35
      %p39 = pneg %p33
      %p40 = scmp.eq.s32.totalorder %s24, 1
      %p41 = por %p39, %p40
      %p42 = scmp.ne.s32.totalorder %s34, %s37
      %p43 = scmp.eq.s32.totalorder %s24, 0
      %p44 = por %p42, %p43
      %p45 = scmp.ne.s32.totalorder %s34, %s37
      %p46 = scmp.eq.s32.totalorder %s29, 1
      %p47 = por %p45, %p46
      %p48 = scmp.ne.s32.totalorder %s37, %s38
      %p49 = scmp.eq.s32.totalorder %s29, 0
      %p50 = por %p48, %p49
      %p51 = scmp.ne.s32.totalorder %s37, %s38
      %p52 = scmp.eq.s32.totalorder %s30, 1
      %p53 = por %p51, %p52
      %p55 = scmp.ne.s32.totalorder %s38, %s54
      %p56 = scmp.eq.s32.totalorder %s30, 0
      %p57 = por %p55, %p56
      %s58 = ssub.s32 %s24, %s31
      %p59 = scmp.eq.s32.totalorder %s58, 0
      %s61 = sadd.s32 %s60, 1
      %s62 = scalar_select %p59, %s60, %s61
      %p65 = pneg %p59
      %p66 = scmp.eq.s32.totalorder %s24, 1
      %p67 = por %p65, %p66
      %p68 = scmp.ne.s32.totalorder %s60, %s63
      %p69 = scmp.eq.s32.totalorder %s24, 0
      %p70 = por %p68, %p69
      %p71 = scmp.ne.s32.totalorder %s60, %s63
      %p72 = scmp.eq.s32.totalorder %s29, 1
      %p73 = por %p71, %p72
      %p74 = scmp.ne.s32.totalorder %s63, %s64
      %p75 = scmp.eq.s32.totalorder %s29, 0
      %p76 = por %p74, %p75
      %p77 = scmp.ne.s32.totalorder %s63, %s64
      %p78 = scmp.eq.s32.totalorder %s30, 1
      %p79 = por %p77, %p78
      %p81 = scmp.ne.s32.totalorder %s64, %s80
      %p82 = scmp.eq.s32.totalorder %s30, 0
      %p83 = por %p81, %p82
      %s84 = ssub.s32 %s24, %s31
      %p85 = scmp.eq.s32.totalorder %s84, 0
      %s87 = sadd.s32 %s86, 1
      %s88 = scalar_select %p85, %s86, %s87
      %p91 = pneg %p85
      %p92 = scmp.eq.s32.totalorder %s24, 1
      %p93 = por %p91, %p92
      %p94 = scmp.ne.s32.totalorder %s86, %s89
      %p95 = scmp.eq.s32.totalorder %s24, 0
      %p96 = por %p94, %p95
      %p97 = scmp.ne.s32.totalorder %s86, %s89
      %p98 = scmp.eq.s32.totalorder %s29, 1
      %p99 = por %p97, %p98
      %p100 = scmp.ne.s32.totalorder %s89, %s90
      %p101 = scmp.eq.s32.totalorder %s29, 0
      %p102 = por %p100, %p101
      %p103 = scmp.ne.s32.totalorder %s89, %s90
      %p104 = scmp.eq.s32.totalorder %s30, 1
      %p105 = por %p103, %p104
      %p107 = scmp.ne.s32.totalorder %s90, %s106
      %p108 = scmp.eq.s32.totalorder %s30, 0
      %p109 = por %p107, %p108
      %s111 = sadd.s32 %s110, 1
      %p114 = scmp.eq.s32.totalorder %s24, 1
      %p115 = scmp.ne.s32.totalorder %s110, %s112
      %p116 = scmp.eq.s32.totalorder %s24, 0
      %p117 = por %p115, %p116
      %p118 = scmp.ne.s32.totalorder %s110, %s112
      %p119 = scmp.eq.s32.totalorder %s29, 1
      %p120 = por %p118, %p119
      %p121 = scmp.ne.s32.totalorder %s112, %s113
      %p122 = scmp.eq.s32.totalorder %s29, 0
      %p123 = por %p121, %p122
      %p124 = scmp.ne.s32.totalorder %s112, %s113
      %p125 = scmp.eq.s32.totalorder %s30, 1
      %p126 = por %p124, %p125
      %p128 = scmp.ne.s32.totalorder %s113, %s127
      %p129 = scmp.eq.s32.totalorder %s30, 0
      %p130 = por %p128, %p129
      %s132 = sadd.s32 %s131, 1
      %p135 = scmp.eq.s32.totalorder %s24, 1
      %p136 = scmp.ne.s32.totalorder %s131, %s133
      %p137 = scmp.eq.s32.totalorder %s24, 0
      %p138 = por %p136, %p137
      %p139 = scmp.ne.s32.totalorder %s131, %s133
      %p140 = scmp.eq.s32.totalorder %s29, 1
      %p141 = por %p139, %p140
      %p142 = scmp.ne.s32.totalorder %s133, %s134
      %p143 = scmp.eq.s32.totalorder %s29, 0
      %p144 = por %p142, %p143
      %p145 = scmp.ne.s32.totalorder %s133, %s134
      %p146 = scmp.eq.s32.totalorder %s30, 1
      %p147 = por %p145, %p146
      %p149 = scmp.ne.s32.totalorder %s134, %s148
      %p150 = scmp.eq.s32.totalorder %s30, 0
      %p151 = por %p149, %p150
      %s153 = sadd.s32 %s152, 1
      %p156 = scmp.eq.s32.totalorder %s24, 1
      %p157 = scmp.ne.s32.totalorder %s152, %s154
      %p158 = scmp.eq.s32.totalorder %s24, 0
      %p159 = por %p157, %p158
      %p160 = scmp.ne.s32.totalorder %s152, %s154
      %p161 = scmp.eq.s32.totalorder %s29, 1
      %p162 = por %p160, %p161
      %p163 = scmp.ne.s32.totalorder %s154, %s155
      %p164 = scmp.eq.s32.totalorder %s29, 0
      %p165 = por %p163, %p164
      %p166 = scmp.ne.s32.totalorder %s154, %s155
      %p167 = scmp.eq.s32.totalorder %s30, 1
      %p168 = por %p166, %p167
      %p170 = scmp.ne.s32.totalorder %s155, %s169
      %p171 = scmp.eq.s32.totalorder %s30, 0
      %p172 = por %p170, %p171
      %s174 = sadd.s32 %s173, 1
      %p177 = scmp.eq.s32.totalorder %s24, 1
      %p178 = scmp.ne.s32.totalorder %s173, %s175
      %p179 = scmp.eq.s32.totalorder %s24, 0
      %p180 = por %p178, %p179
      %p181 = scmp.ne.s32.totalorder %s173, %s175
      %p182 = scmp.eq.s32.totalorder %s29, 1
      %p183 = por %p181, %p182
      %p184 = scmp.ne.s32.totalorder %s175, %s176
      %p185 = scmp.eq.s32.totalorder %s29, 0
      %p186 = por %p184, %p185
      %p187 = scmp.ne.s32.totalorder %s175, %s176
      %p188 = scmp.eq.s32.totalorder %s30, 1
      %p189 = por %p187, %p188
      %p191 = scmp.ne.s32.totalorder %s176, %s190
      %p192 = scmp.eq.s32.totalorder %s30, 0
      %p193 = por %p191, %p192
      %s194 = ssub.s32 %s24, %s31
      %p195 = scmp.eq.s32.totalorder %s194, 0
      %s197 = sadd.s32 %s196, 1
      %s198 = scalar_select %p195, %s196, %s197
      %p201 = pneg %p195
      %p202 = scmp.eq.s32.totalorder %s24, 1
      %p203 = por %p201, %p202
      %p204 = scmp.ne.s32.totalorder %s196, %s199
      %p205 = scmp.eq.s32.totalorder %s24, 0
      %p206 = por %p204, %p205
      %p207 = scmp.ne.s32.totalorder %s196, %s199
      %p208 = scmp.eq.s32.totalorder %s29, 1
      %p209 = por %p207, %p208
      %p210 = scmp.ne.s32.totalorder %s199, %s200
      %p211 = scmp.eq.s32.totalorder %s29, 0
      %p212 = por %p210, %p211
      %p213 = scmp.ne.s32.totalorder %s199, %s200
      %p214 = scmp.eq.s32.totalorder %s30, 1
      %p215 = por %p213, %p214
      %p217 = scmp.ne.s32.totalorder %s200, %s216
      %p218 = scmp.eq.s32.totalorder %s30, 0
      %p219 = por %p217, %p218
      %p220 = scmp.le.s32.totalorder 1, %s24
      %p221 = scmp.lt.s32.totalorder %s24, 3
      %p222 = pnand %p220, %p221
      %p223 = pneg %p222
      // Predicated region
      $region9: #{tpu_custom_call.1} parent=5 // pred_check
        _
      $region10: #{tpu_custom_call.1} parent=5 // pred_check_branch
        %225 = sbr.rel (%p222) target = $region12
      $region11: #{tpu_custom_call.1} parent=5 // pred_region
        %s226 = ssub.s32 %s24, 1
        // Predicated region
        $region13: #{tpu_custom_call.1} parent=11 // pred_check
          %p227 = pneg %p123
        $region14: #{tpu_custom_call.1} parent=11 // pred_check_branch
          %229 = sbr.rel (%p227) target = $region16
        $region15: #{tpu_custom_call.1} parent=11 // pred_region
          %s231 = ssub.s32 512, 512
          %232 = vsyncadd [#allocation9], %s231
          %s233 = sshll.u32 [#allocation8], 4
          %s234 = int_to_ptr.vmem [resolvable:$true] %s233
          %239 = dma.hbm_to_vmem [thread:$0]  %s3, 512, %s234, [#allocation9], 128, 128, 8
        $region16: #{tpu_custom_call.1} parent=11 // pred_fallthru
          _
        // Predicated region
        $region17: #{tpu_custom_call.1} parent=11 // pred_check
          %p240 = pneg %p144
        $region18: #{tpu_custom_call.1} parent=11 // pred_check_branch
          %242 = sbr.rel (%p240) target = $region20
        $region19: #{tpu_custom_call.1} parent=11 // pred_region
          %s244 = ssub.s32 512, 512
          %245 = vsyncadd [#allocation9], %s244
          %s246 = sshll.u32 [#allocation10], 4
          %s247 = int_to_ptr.vmem [resolvable:$true] %s246
          %252 = dma.hbm_to_vmem [thread:$0]  %s4, 512, %s247, [#allocation9], 128, 128, 8
        $region20: #{tpu_custom_call.1} parent=11 // pred_fallthru
          _
        // Predicated region
        $region21: #{tpu_custom_call.1} parent=11 // pred_check
          %p253 = pneg %p165
        $region22: #{tpu_custom_call.1} parent=11 // pred_check_branch
          %255 = sbr.rel (%p253) target = $region24
        $region23: #{tpu_custom_call.1} parent=11 // pred_region
          %s257 = ssub.s32 512, 512
          %258 = vsyncadd [#allocation12], %s257
          %s259 = sshll.u32 [#allocation11], 4
          %s260 = int_to_ptr.vmem [resolvable:$true] %s259
          %265 = dma.hbm_to_vmem [thread:$0]  %s5, 512, %s260, [#allocation12], 128, 128, 8
        $region24: #{tpu_custom_call.1} parent=11 // pred_fallthru
          _
        // Predicated region
        $region25: #{tpu_custom_call.1} parent=11 // pred_check
          %p266 = pneg %p186
        $region26: #{tpu_custom_call.1} parent=11 // pred_check_branch
          %268 = sbr.rel (%p266) target = $region28
        $region27: #{tpu_custom_call.1} parent=11 // pred_region
          %s270 = ssub.s32 512, 512
          %271 = vsyncadd [#allocation12], %s270
          %s272 = sshll.u32 [#allocation13], 4
          %s273 = int_to_ptr.vmem [resolvable:$true] %s272
          %278 = dma.hbm_to_vmem [thread:$0]  %s6, 512, %s273, [#allocation12], 128, 128, 8
        $region28: #{tpu_custom_call.1} parent=11 // pred_fallthru
          _
      $region12: #{tpu_custom_call.1} parent=5 // pred_fallthru
        _
      %p279 = scmp.lt.s32.totalorder %s24, 2
      // Predicated region
      $region29: #{tpu_custom_call.1} parent=5 // pred_check
        %p280 = pneg %p279
      $region30: #{tpu_custom_call.1} parent=5 // pred_check_branch
        %282 = sbr.rel (%p280) target = $region32
      $region31: #{tpu_custom_call.1} parent=5 // pred_region
        // Predicated region
        $region33: #{tpu_custom_call.1} parent=31 // pred_check
          %p283 = pneg %p44
        $region34: #{tpu_custom_call.1} parent=31 // pred_check_branch
          %285 = sbr.rel (%p283) target = $region36
        $region35: #{tpu_custom_call.1} parent=31 // pred_region
          %s286 = sand.u32 %s34, 1
          %s287 = scalar_lea.sflag [#allocation3], %s286
          %s288 = sand.u32 %s34, 1
          %s289 = smul.addr %s288, 8
          %s290 = scalar_lea.vmem [#allocation2], %s289
          %s292 = ssub.s32 128, 128
          %293 = vsyncadd %s287, %s292
          %s294 = smul.addr %s24, 128
          %s295 = scalar_lea.hbm %s0, %s294
          %s297 = sshll.u32 %s290, 4
          %s298 = int_to_ptr.vmem [resolvable:$true] %s297
          %300 = dma.hbm_to_vmem [thread:$0]  %s295, 128, %s298, %s287
        $region36: #{tpu_custom_call.1} parent=31 // pred_fallthru
          _
        // Predicated region
        $region37: #{tpu_custom_call.1} parent=31 // pred_check
          %p301 = pneg %p70
        $region38: #{tpu_custom_call.1} parent=31 // pred_check_branch
          %303 = sbr.rel (%p301) target = $region40
        $region39: #{tpu_custom_call.1} parent=31 // pred_region
          %s304 = sand.u32 %s24, 1
          %s305 = scalar_lea.sflag [#allocation6], %s304
          %s306 = sand.u32 %s60, 1
          %s307 = smul.addr %s306, 8
          %s308 = scalar_lea.vmem [#allocation5], %s307
          %s310 = ssub.s32 128, 128
          %311 = vsyncadd %s305, %s310
          %s312 = smul.addr %s24, 128
          %s313 = scalar_lea.hbm %s1, %s312
          %s315 = sshll.u32 %s308, 4
          %s316 = int_to_ptr.vmem [resolvable:$true] %s315
          %318 = dma.hbm_to_vmem [thread:$0]  %s313, 128, %s316, %s305
        $region40: #{tpu_custom_call.1} parent=31 // pred_fallthru
          _
        // Predicated region
        $region41: #{tpu_custom_call.1} parent=31 // pred_check
          %p319 = pneg %p96
        $region42: #{tpu_custom_call.1} parent=31 // pred_check_branch
          %321 = sbr.rel (%p319) target = $region44
        $region43: #{tpu_custom_call.1} parent=31 // pred_region
          %s322 = sand.u32 %s24, 1
          %s323 = scalar_lea.sflag [#allocation6], %s322
          %s324 = sand.u32 %s86, 1
          %s325 = smul.addr %s324, 8
          %s326 = scalar_lea.vmem [#allocation7], %s325
          %s328 = ssub.s32 128, 128
          %329 = vsyncadd %s323, %s328
          %s330 = smul.addr %s24, 128
          %s331 = scalar_lea.hbm %s2, %s330
          %s333 = sshll.u32 %s326, 4
          %s334 = int_to_ptr.vmem [resolvable:$true] %s333
          %336 = dma.hbm_to_vmem [thread:$0]  %s331, 128, %s334, %s323
        $region44: #{tpu_custom_call.1} parent=31 // pred_fallthru
          _
      $region32: #{tpu_custom_call.1} parent=5 // pred_fallthru
        _
      %p337 = scmp.le.s32.totalorder 1, %s24
      %p338 = scmp.lt.s32.totalorder %s24, 3
      %p339 = pnand %p337, %p338
      %p340 = pneg %p339
      // Predicated region
      $region45: #{tpu_custom_call.1} parent=5 // pred_check
        _
      $region46: #{tpu_custom_call.1} parent=5 // pred_check_branch
        %342 = sbr.rel (%p339) target = $region48
      $region47: #{tpu_custom_call.1} parent=5 // pred_region
        %s343 = ssub.s32 %s24, 1
        %s344 = sand.u32 %s37, 1
        %s345 = scalar_lea.sflag [#allocation3], %s344
        %s346 = sand.u32 %s37, 1
        %s347 = smul.addr %s346, 8
        %s348 = scalar_lea.vmem [#allocation2], %s347
        // Predicated region
        $region49: #{tpu_custom_call.1} parent=47 // pred_check
          %p349 = pneg %p50
        $region50: #{tpu_custom_call.1} parent=47 // pred_check_branch
          %351 = sbr.rel (%p349) target = $region52
        $region51: #{tpu_custom_call.1} parent=47 // pred_region
          %352 = dma.done %s345, 128
        $region52: #{tpu_custom_call.1} parent=47 // pred_fallthru
          _
        %s353 = sand.u32 %s29, 1
        %s354 = scalar_lea.sflag [#allocation6], %s353
        %s355 = sand.u32 %s63, 1
        %s356 = smul.addr %s355, 8
        %s357 = scalar_lea.vmem [#allocation5], %s356
        // Predicated region
        $region53: #{tpu_custom_call.1} parent=47 // pred_check
          %p358 = pneg %p76
        $region54: #{tpu_custom_call.1} parent=47 // pred_check_branch
          %360 = sbr.rel (%p358) target = $region56
        $region55: #{tpu_custom_call.1} parent=47 // pred_region
          %361 = dma.done %s354, 128
        $region56: #{tpu_custom_call.1} parent=47 // pred_fallthru
          _
        %s362 = sand.u32 %s29, 1
        %s363 = scalar_lea.sflag [#allocation6], %s362
        %s364 = sand.u32 %s89, 1
        %s365 = smul.addr %s364, 8
        %s366 = scalar_lea.vmem [#allocation7], %s365
        // Predicated region
        $region57: #{tpu_custom_call.1} parent=47 // pred_check
          %p367 = pneg %p102
        $region58: #{tpu_custom_call.1} parent=47 // pred_check_branch
          %369 = sbr.rel (%p367) target = $region60
        $region59: #{tpu_custom_call.1} parent=47 // pred_region
          %370 = dma.done %s363, 128
        $region60: #{tpu_custom_call.1} parent=47 // pred_fallthru
          _
        // Predicated region
        $region61: #{tpu_custom_call.1} parent=47 // pred_check
          %p371 = pneg %p123
        $region62: #{tpu_custom_call.1} parent=47 // pred_check_branch
          %373 = sbr.rel (%p371) target = $region64
        $region63: #{tpu_custom_call.1} parent=47 // pred_region
          %374 = dma.done [#allocation9], 512
        $region64: #{tpu_custom_call.1} parent=47 // pred_fallthru
          _
        // Predicated region
        $region65: #{tpu_custom_call.1} parent=47 // pred_check
          %p375 = pneg %p144
        $region66: #{tpu_custom_call.1} parent=47 // pred_check_branch
          %377 = sbr.rel (%p375) target = $region68
        $region67: #{tpu_custom_call.1} parent=47 // pred_region
          %378 = dma.done [#allocation9], 512
        $region68: #{tpu_custom_call.1} parent=47 // pred_fallthru
          _
        // Predicated region
        $region69: #{tpu_custom_call.1} parent=47 // pred_check
          %p379 = pneg %p165
        $region70: #{tpu_custom_call.1} parent=47 // pred_check_branch
          %381 = sbr.rel (%p379) target = $region72
        $region71: #{tpu_custom_call.1} parent=47 // pred_region
          %382 = dma.done [#allocation12], 512
        $region72: #{tpu_custom_call.1} parent=47 // pred_fallthru
          _
        // Predicated region
        $region73: #{tpu_custom_call.1} parent=47 // pred_check
          %p383 = pneg %p186
        $region74: #{tpu_custom_call.1} parent=47 // pred_check_branch
          %385 = sbr.rel (%p383) target = $region76
        $region75: #{tpu_custom_call.1} parent=47 // pred_region
          %386 = dma.done [#allocation12], 512
        $region76: #{tpu_custom_call.1} parent=47 // pred_fallthru
          _
        %s387 = sand.u32 %s37, 1
        %s388 = scalar_lea.sflag [#allocation3], %s387
        %s389 = sand.u32 %s37, 1
        %s390 = smul.addr %s389, 8
        %s391 = scalar_lea.vmem [#allocation2], %s390
        %p392 = pneg %p50
        %p393 = pneg %p47
        %s394 = sand.u32 %s29, 1
        %s395 = scalar_lea.sflag [#allocation6], %s394
        %s396 = sand.u32 %s63, 1
        %s397 = smul.addr %s396, 8
        %s398 = scalar_lea.vmem [#allocation5], %s397
        %p399 = pneg %p76
        %p400 = pneg %p73
        %s401 = sand.u32 %s29, 1
        %s402 = scalar_lea.sflag [#allocation6], %s401
        %s403 = sand.u32 %s89, 1
        %s404 = smul.addr %s403, 8
        %s405 = scalar_lea.vmem [#allocation7], %s404
        %p406 = pneg %p102
        %p407 = pneg %p99
        %p408 = pneg %p123
        %p409 = pneg %p120
        %p410 = pneg %p144
        %p411 = pneg %p141
        %p412 = pneg %p165
        %p413 = pneg %p162
        %p414 = pneg %p186
        %p415 = pneg %p183
        %p416 = pneg %p212
        %p417 = pneg %p209
        %s418 = sand.u32 %s199, 1
        %s419 = scalar_lea.sflag [#allocation4], %s418
        %s420 = sand.u32 %s199, 1
        %s421 = smul.addr %s420, 8
        %s422 = scalar_lea.vmem [#allocation14], %s421
        %v423 = vld [vmem:[%s348] sm:$0xff]
        %v424 = vld [vmem:[#allocation8] sm:$0xff]
        %v425 = vld [vmem:[#allocation8 + $0x8] sm:$0xff]
        %v426 = vld [vmem:[#allocation8 + $0x10] sm:$0xff]
        %v427 = vld [vmem:[#allocation8 + $0x18] sm:$0xff]
        %vm428 = vcmask 261120
        %v430 = vsel %vm428, %v423, 0
        %432 = vmatprep.subr.mxu0 0.0
        %433 = vmatpush1.msra.mxu0 %v424
        %434 = vmatprep.subr.mxu0 0.0
        %435 = vmatpush1.msra.mxu0 %v425
        %436 = vmatprep.subr.mxu0 0.0
        %437 = vmatpush1.msra.mxu0 %v426
        %438 = vmatprep.subr.mxu0 0.0
        %439 = vmatpush1.msra.mxu0 %v427
        %440 = vmatprep.subr.mxu0 0.0
        %441 = vmatpush1.msra.mxu0 0.0
        %442 = vmatprep.subr.mxu0 0.0
        %443 = vmatpush1.msra.mxu0 0.0
        %444 = vmatprep.subr.mxu0 0.0
        %445 = vmatpush1.msra.mxu0 0.0
        %446 = vmatprep.subr.mxu0 0.0
        %447 = vmatpush1.msra.mxu0 0.0
        %448 = vmatprep.subr.mxu0 0.0
        %449 = vmatpush1.msra.mxu0 0.0
        %450 = vmatprep.subr.mxu0 0.0
        %451 = vmatpush1.msra.mxu0 0.0
        %452 = vmatprep.subr.mxu0 0.0
        %453 = vmatpush1.msra.mxu0 0.0
        %454 = vmatprep.subr.mxu0 0.0
        %455 = vmatpush1.msra.mxu0 0.0
        %456 = vmatprep.subr.mxu0 0.0
        %457 = vmatpush1.msra.mxu0 0.0
        %458 = vmatprep.subr.mxu0 0.0
        %459 = vmatpush1.msra.mxu0 0.0
        %460 = vmatprep.subr.mxu0 0.0
        %461 = vmatpush1.msra.mxu0 0.0
        %462 = vmatprep.subr.mxu0 0.0
        %463 = vmatpush1.msra.mxu0 0.0
        %464 = vmatprep.subr.mxu0 0.0
        %465 = vmatpush1.msra.mxu0 0.0
        %466 = vmatprep.subr.mxu0 0.0
        %467 = vmatpush1.msra.mxu0 0.0
        %468 = vmatprep.subr.mxu0 0.0
        %469 = vmatpush1.msra.mxu0 0.0
        %470 = vmatprep.subr.mxu0 0.0
        %471 = vmatpush1.msra.mxu0 0.0
        %472 = vmatprep.subr.mxu0 0.0
        %473 = vmatpush1.msra.mxu0 0.0
        %474 = vmatprep.subr.mxu0 0.0
        %475 = vmatpush1.msra.mxu0 0.0
        %476 = vmatprep.subr.mxu0 0.0
        %477 = vmatpush1.msra.mxu0 0.0
        %478 = vmatprep.subr.mxu0 0.0
        %479 = vmatpush1.msra.mxu0 0.0
        %480 = vmatprep.subr.mxu0 0.0
        %481 = vmatpush1.msra.mxu0 0.0
        %482 = vmatprep.subr.mxu0 0.0
        %483 = vmatpush1.msra.mxu0 0.0
        %484 = vmatprep.subr.mxu0 0.0
        %485 = vmatpush1.msra.mxu0 0.0
        %486 = vmatprep.subr.mxu0 0.0
        %487 = vmatpush1.msra.mxu0 0.0
        %488 = vmatprep.subr.mxu0 0.0
        %489 = vmatpush1.msra.mxu0 0.0
        %490 = vmatprep.subr.mxu0 0.0
        %491 = vmatpush1.msra.mxu0 0.0
        %492 = vmatprep.subr.mxu0 0.0
        %493 = vmatpush1.msra.mxu0 0.0
        %494 = vmatprep.subr.mxu0 0.0
        %495 = vmatpush1.msra.mxu0 0.0
        %496 = vmatprep.mubr.f32.mxu0 0.0
        %497 = vmatmul.mubr.f32.gmra.mrb[0].mxu0 %v430
        %v498 = vpop.f32.mrb[0].mxu0
        %v499 = vadd.f32 0.0, %v498
        %v500 = vpop.f32.mrb[0].mxu0
        %501 = vdwg.mxu0
        %v502 = vmul.f32 %v499, 0.35355338
        %v503 = vld [vmem:[%s357] sm:$0xff]
        %v504 = vld [vmem:[#allocation10] sm:$0xff]
        %v505 = vld [vmem:[#allocation10 + $0x8] sm:$0xff]
        %v506 = vld [vmem:[#allocation10 + $0x10] sm:$0xff]
        %v507 = vld [vmem:[#allocation10 + $0x18] sm:$0xff]
        %v509 = vsel %vm428, %v503, 0
        %511 = vmatprep.subr.mxu0 0.0
        %512 = vmatpush1.msra.mxu0 %v504
        %513 = vmatprep.subr.mxu0 0.0
        %514 = vmatpush1.msra.mxu0 %v505
        %515 = vmatprep.subr.mxu0 0.0
        %516 = vmatpush1.msra.mxu0 %v506
        %517 = vmatprep.subr.mxu0 0.0
        %518 = vmatpush1.msra.mxu0 %v507
        %519 = vmatprep.subr.mxu0 0.0
        %520 = vmatpush1.msra.mxu0 0.0
        %521 = vmatprep.subr.mxu0 0.0
        %522 = vmatpush1.msra.mxu0 0.0
        %523 = vmatprep.subr.mxu0 0.0
        %524 = vmatpush1.msra.mxu0 0.0
        %525 = vmatprep.subr.mxu0 0.0
        %526 = vmatpush1.msra.mxu0 0.0
        %527 = vmatprep.subr.mxu0 0.0
        %528 = vmatpush1.msra.mxu0 0.0
        %529 = vmatprep.subr.mxu0 0.0
        %530 = vmatpush1.msra.mxu0 0.0
        %531 = vmatprep.subr.mxu0 0.0
        %532 = vmatpush1.msra.mxu0 0.0
        %533 = vmatprep.subr.mxu0 0.0
        %534 = vmatpush1.msra.mxu0 0.0
        %535 = vmatprep.subr.mxu0 0.0
        %536 = vmatpush1.msra.mxu0 0.0
        %537 = vmatprep.subr.mxu0 0.0
        %538 = vmatpush1.msra.mxu0 0.0
        %539 = vmatprep.subr.mxu0 0.0
        %540 = vmatpush1.msra.mxu0 0.0
        %541 = vmatprep.subr.mxu0 0.0
        %542 = vmatpush1.msra.mxu0 0.0
        %543 = vmatprep.subr.mxu0 0.0
        %544 = vmatpush1.msra.mxu0 0.0
        %545 = vmatprep.subr.mxu0 0.0
        %546 = vmatpush1.msra.mxu0 0.0
        %547 = vmatprep.subr.mxu0 0.0
        %548 = vmatpush1.msra.mxu0 0.0
        %549 = vmatprep.subr.mxu0 0.0
        %550 = vmatpush1.msra.mxu0 0.0
        %551 = vmatprep.subr.mxu0 0.0
        %552 = vmatpush1.msra.mxu0 0.0
        %553 = vmatprep.subr.mxu0 0.0
        %554 = vmatpush1.msra.mxu0 0.0
        %555 = vmatprep.subr.mxu0 0.0
        %556 = vmatpush1.msra.mxu0 0.0
        %557 = vmatprep.subr.mxu0 0.0
        %558 = vmatpush1.msra.mxu0 0.0
        %559 = vmatprep.subr.mxu0 0.0
        %560 = vmatpush1.msra.mxu0 0.0
        %561 = vmatprep.subr.mxu0 0.0
        %562 = vmatpush1.msra.mxu0 0.0
        %563 = vmatprep.subr.mxu0 0.0
        %564 = vmatpush1.msra.mxu0 0.0
        %565 = vmatprep.subr.mxu0 0.0
        %566 = vmatpush1.msra.mxu0 0.0
        %567 = vmatprep.subr.mxu0 0.0
        %568 = vmatpush1.msra.mxu0 0.0
        %569 = vmatprep.subr.mxu0 0.0
        %570 = vmatpush1.msra.mxu0 0.0
        %571 = vmatprep.subr.mxu0 0.0
        %572 = vmatpush1.msra.mxu0 0.0
        %573 = vmatprep.subr.mxu0 0.0
        %574 = vmatpush1.msra.mxu0 0.0
        %575 = vmatprep.mubr.f32.mxu0 0.0
        %576 = vmatmul.mubr.f32.gmra.mrb[0].mxu0 %v509
        %v577 = vpop.f32.mrb[0].mxu0
        %v578 = vadd.f32 0.0, %v577
        %v579 = vpop.f32.mrb[0].mxu0
        %580 = vdwg.mxu0
        %v581 = vld [vmem:[%s366] sm:$0xff]
        %v582 = vld [vmem:[#allocation11] sm:$0xff]
        %v583 = vld [vmem:[#allocation11 + $0x8] sm:$0xff]
        %v584 = vld [vmem:[#allocation11 + $0x10] sm:$0xff]
        %v585 = vld [vmem:[#allocation11 + $0x18] sm:$0xff]
        %v587 = vsel %vm428, %v581, 0
        %589 = vmatprep.subr.mxu0 0.0
        %590 = vmatpush1.msra.mxu0 %v582
        %591 = vmatprep.subr.mxu0 0.0
        %592 = vmatpush1.msra.mxu0 %v583
        %593 = vmatprep.subr.mxu0 0.0
        %594 = vmatpush1.msra.mxu0 %v584
        %595 = vmatprep.subr.mxu0 0.0
        %596 = vmatpush1.msra.mxu0 %v585
        %597 = vmatprep.subr.mxu0 0.0
        %598 = vmatpush1.msra.mxu0 0.0
        %599 = vmatprep.subr.mxu0 0.0
        %600 = vmatpush1.msra.mxu0 0.0
        %601 = vmatprep.subr.mxu0 0.0
        %602 = vmatpush1.msra.mxu0 0.0
        %603 = vmatprep.subr.mxu0 0.0
        %604 = vmatpush1.msra.mxu0 0.0
        %605 = vmatprep.subr.mxu0 0.0
        %606 = vmatpush1.msra.mxu0 0.0
        %607 = vmatprep.subr.mxu0 0.0
        %608 = vmatpush1.msra.mxu0 0.0
        %609 = vmatprep.subr.mxu0 0.0
        %610 = vmatpush1.msra.mxu0 0.0
        %611 = vmatprep.subr.mxu0 0.0
        %612 = vmatpush1.msra.mxu0 0.0
        %613 = vmatprep.subr.mxu0 0.0
        %614 = vmatpush1.msra.mxu0 0.0
        %615 = vmatprep.subr.mxu0 0.0
        %616 = vmatpush1.msra.mxu0 0.0
        %617 = vmatprep.subr.mxu0 0.0
        %618 = vmatpush1.msra.mxu0 0.0
        %619 = vmatprep.subr.mxu0 0.0
        %620 = vmatpush1.msra.mxu0 0.0
        %621 = vmatprep.subr.mxu0 0.0
        %622 = vmatpush1.msra.mxu0 0.0
        %623 = vmatprep.subr.mxu0 0.0
        %624 = vmatpush1.msra.mxu0 0.0
        %625 = vmatprep.subr.mxu0 0.0
        %626 = vmatpush1.msra.mxu0 0.0
        %627 = vmatprep.subr.mxu0 0.0
        %628 = vmatpush1.msra.mxu0 0.0
        %629 = vmatprep.subr.mxu0 0.0
        %630 = vmatpush1.msra.mxu0 0.0
        %631 = vmatprep.subr.mxu0 0.0
        %632 = vmatpush1.msra.mxu0 0.0
        %633 = vmatprep.subr.mxu0 0.0
        %634 = vmatpush1.msra.mxu0 0.0
        %635 = vmatprep.subr.mxu0 0.0
        %636 = vmatpush1.msra.mxu0 0.0
        %637 = vmatprep.subr.mxu0 0.0
        %638 = vmatpush1.msra.mxu0 0.0
        %639 = vmatprep.subr.mxu0 0.0
        %640 = vmatpush1.msra.mxu0 0.0
        %641 = vmatprep.subr.mxu0 0.0
        %642 = vmatpush1.msra.mxu0 0.0
        %643 = vmatprep.subr.mxu0 0.0
        %644 = vmatpush1.msra.mxu0 0.0
        %645 = vmatprep.subr.mxu0 0.0
        %646 = vmatpush1.msra.mxu0 0.0
        %647 = vmatprep.subr.mxu0 0.0
        %648 = vmatpush1.msra.mxu0 0.0
        %649 = vmatprep.subr.mxu0 0.0
        %650 = vmatpush1.msra.mxu0 0.0
        %651 = vmatprep.subr.mxu0 0.0
        %652 = vmatpush1.msra.mxu0 0.0
        %653 = vmatprep.mubr.f32.mxu0 0.0
        %654 = vmatmul.mubr.f32.gmra.mrb[0].mxu0 %v587
        %v655 = vpop.f32.mrb[0].mxu0
        %v656 = vadd.f32 0.0, %v655
        %v657 = vpop.f32.mrb[0].mxu0
        %658 = vdwg.mxu0
        %vm659 = vcmask 64512
        %v661 = vsel %vm659, %v502, 0
        %v664 = vsel %vm659, %v578, 0
        %666 = vmatprep.subr.mxu0 0.0
        %667 = vmatpush1.xpose.msra.mxu0 %v664
        %668 = vmatprep.subr.mxu0 0.0
        %669 = vmatpush1.xpose.msra.mxu0 0.0
        %670 = vmatprep.subr.mxu0 0.0
        %671 = vmatpush1.xpose.msra.mxu0 0.0
        %672 = vmatprep.subr.mxu0 0.0
        %673 = vmatpush1.xpose.msra.mxu0 0.0
        %674 = vmatprep.subr.mxu0 0.0
        %675 = vmatpush1.xpose.msra.mxu0 0.0
        %676 = vmatprep.subr.mxu0 0.0
        %677 = vmatpush1.xpose.msra.mxu0 0.0
        %678 = vmatprep.subr.mxu0 0.0
        %679 = vmatpush1.xpose.msra.mxu0 0.0
        %680 = vmatprep.subr.mxu0 0.0
        %681 = vmatpush1.xpose.msra.mxu0 0.0
        %682 = vmatprep.subr.mxu0 0.0
        %683 = vmatpush1.xpose.msra.mxu0 0.0
        %684 = vmatprep.subr.mxu0 0.0
        %685 = vmatpush1.xpose.msra.mxu0 0.0
        %686 = vmatprep.subr.mxu0 0.0
        %687 = vmatpush1.xpose.msra.mxu0 0.0
        %688 = vmatprep.subr.mxu0 0.0
        %689 = vmatpush1.xpose.msra.mxu0 0.0
        %690 = vmatprep.subr.mxu0 0.0
        %691 = vmatpush1.xpose.msra.mxu0 0.0
        %692 = vmatprep.subr.mxu0 0.0
        %693 = vmatpush1.xpose.msra.mxu0 0.0
        %694 = vmatprep.subr.mxu0 0.0
        %695 = vmatpush1.xpose.msra.mxu0 0.0
        %696 = vmatprep.subr.mxu0 0.0
        %697 = vmatpush1.xpose.msra.mxu0 0.0
        %698 = vmatprep.subr.mxu0 0.0
        %699 = vmatpush1.xpose.msra.mxu0 0.0
        %700 = vmatprep.subr.mxu0 0.0
        %701 = vmatpush1.xpose.msra.mxu0 0.0
        %702 = vmatprep.subr.mxu0 0.0
        %703 = vmatpush1.xpose.msra.mxu0 0.0
        %704 = vmatprep.subr.mxu0 0.0
        %705 = vmatpush1.xpose.msra.mxu0 0.0
        %706 = vmatprep.subr.mxu0 0.0
        %707 = vmatpush1.xpose.msra.mxu0 0.0
        %708 = vmatprep.subr.mxu0 0.0
        %709 = vmatpush1.xpose.msra.mxu0 0.0
        %710 = vmatprep.subr.mxu0 0.0
        %711 = vmatpush1.xpose.msra.mxu0 0.0
        %712 = vmatprep.subr.mxu0 0.0
        %713 = vmatpush1.xpose.msra.mxu0 0.0
        %714 = vmatprep.subr.mxu0 0.0
        %715 = vmatpush1.xpose.msra.mxu0 0.0
        %716 = vmatprep.subr.mxu0 0.0
        %717 = vmatpush1.xpose.msra.mxu0 0.0
        %718 = vmatprep.subr.mxu0 0.0
        %719 = vmatpush1.xpose.msra.mxu0 0.0
        %720 = vmatprep.subr.mxu0 0.0
        %721 = vmatpush1.xpose.msra.mxu0 0.0
        %722 = vmatprep.subr.mxu0 0.0
        %723 = vmatpush1.xpose.msra.mxu0 0.0
        %724 = vmatprep.subr.mxu0 0.0
        %725 = vmatpush1.xpose.msra.mxu0 0.0
        %726 = vmatprep.subr.mxu0 0.0
        %727 = vmatpush1.xpose.msra.mxu0 0.0
        %728 = vmatprep.subr.mxu0 0.0
        %729 = vmatpush1.xpose.msra.mxu0 0.0
        %730 = vmatprep.mubr.f32.mxu0 0.0
        %731 = vmatmul.mubr.f32.gmra.mrb[0].mxu0 %v661
        %v732 = vpop.f32.mrb[0].mxu0
        %v733 = vadd.f32 0.0, %v732
        %v734 = vpop.f32.mrb[0].mxu0
        %735 = vdwg.mxu0
        %v736 = vsel %vm659, %v733, -inf
        %737 = vmax.xlane.f32.xlu0 %v736
        %v738 = vpop.xlane.xlu0 %737
        %v739 = vsub.f32 %v733, %v738
        %v740 = vmul.f32 %v739, 1.442695
        %v741 = vpow.pop %v740
        %v742 = vsel %vm659, %v741, 0.0
        %743 = vadd.xlane.f32.xlu0 %v742
        %v744 = vpop.xlane.xlu0 %743
        %v745 = vrcp.pop %v744
        %v746 = vmul.f32 %v741, %v745
        %v748 = vsel %vm659, %v746, 0
        %750 = vmatprep.subr.mxu0 0.0
        %751 = vmatpush1.msra.mxu0 %v656
        %752 = vmatprep.subr.mxu0 0.0
        %753 = vmatpush1.msra.mxu0 0.0
        %754 = vmatprep.subr.mxu0 0.0
        %755 = vmatpush1.msra.mxu0 0.0
        %756 = vmatprep.subr.mxu0 0.0
        %757 = vmatpush1.msra.mxu0 0.0
        %758 = vmatprep.subr.mxu0 0.0
        %759 = vmatpush1.msra.mxu0 0.0
        %760 = vmatprep.subr.mxu0 0.0
        %761 = vmatpush1.msra.mxu0 0.0
        %762 = vmatprep.subr.mxu0 0.0
        %763 = vmatpush1.msra.mxu0 0.0
        %764 = vmatprep.subr.mxu0 0.0
        %765 = vmatpush1.msra.mxu0 0.0
        %766 = vmatprep.subr.mxu0 0.0
        %767 = vmatpush1.msra.mxu0 0.0
        %768 = vmatprep.subr.mxu0 0.0
        %769 = vmatpush1.msra.mxu0 0.0
        %770 = vmatprep.subr.mxu0 0.0
        %771 = vmatpush1.msra.mxu0 0.0
        %772 = vmatprep.subr.mxu0 0.0
        %773 = vmatpush1.msra.mxu0 0.0
        %774 = vmatprep.subr.mxu0 0.0
        %775 = vmatpush1.msra.mxu0 0.0
        %776 = vmatprep.subr.mxu0 0.0
        %777 = vmatpush1.msra.mxu0 0.0
        %778 = vmatprep.subr.mxu0 0.0
        %779 = vmatpush1.msra.mxu0 0.0
        %780 = vmatprep.subr.mxu0 0.0
        %781 = vmatpush1.msra.mxu0 0.0
        %782 = vmatprep.subr.mxu0 0.0
        %783 = vmatpush1.msra.mxu0 0.0
        %784 = vmatprep.subr.mxu0 0.0
        %785 = vmatpush1.msra.mxu0 0.0
        %786 = vmatprep.subr.mxu0 0.0
        %787 = vmatpush1.msra.mxu0 0.0
        %788 = vmatprep.subr.mxu0 0.0
        %789 = vmatpush1.msra.mxu0 0.0
        %790 = vmatprep.subr.mxu0 0.0
        %791 = vmatpush1.msra.mxu0 0.0
        %792 = vmatprep.subr.mxu0 0.0
        %793 = vmatpush1.msra.mxu0 0.0
        %794 = vmatprep.subr.mxu0 0.0
        %795 = vmatpush1.msra.mxu0 0.0
        %796 = vmatprep.subr.mxu0 0.0
        %797 = vmatpush1.msra.mxu0 0.0
        %798 = vmatprep.subr.mxu0 0.0
        %799 = vmatpush1.msra.mxu0 0.0
        %800 = vmatprep.subr.mxu0 0.0
        %801 = vmatpush1.msra.mxu0 0.0
        %802 = vmatprep.subr.mxu0 0.0
        %803 = vmatpush1.msra.mxu0 0.0
        %804 = vmatprep.subr.mxu0 0.0
        %805 = vmatpush1.msra.mxu0 0.0
        %806 = vmatprep.subr.mxu0 0.0
        %807 = vmatpush1.msra.mxu0 0.0
        %808 = vmatprep.subr.mxu0 0.0
        %809 = vmatpush1.msra.mxu0 0.0
        %810 = vmatprep.subr.mxu0 0.0
        %811 = vmatpush1.msra.mxu0 0.0
        %812 = vmatprep.subr.mxu0 0.0
        %813 = vmatpush1.msra.mxu0 0.0
        %814 = vmatprep.mubr.f32.mxu0 0.0
        %815 = vmatmul.mubr.f32.gmra.mrb[0].mxu0 %v748
        %v816 = vpop.f32.mrb[0].mxu0
        %v817 = vadd.f32 0.0, %v816
        %v818 = vpop.f32.mrb[0].mxu0
        %819 = vdwg.mxu0
        %v820 = vld [vmem:[#allocation13] sm:$0xff]
        %821 = vrot.lane.b32.xlu0 %v502, 120
        %v822 = vpop.permute.xlu0 %821
        %823 = vrot.lane.b32.xlu0 %v578, 120
        %v824 = vpop.permute.xlu0 %823
        %v825 = vsel %vm659, %v822, 0
        %v827 = vsel %vm659, %v824, 0
        %829 = vmatprep.subr.mxu0 0.0
        %830 = vmatpush1.xpose.msra.mxu0 %v827
        %831 = vmatprep.subr.mxu0 0.0
        %832 = vmatpush1.xpose.msra.mxu0 0.0
        %833 = vmatprep.subr.mxu0 0.0
        %834 = vmatpush1.xpose.msra.mxu0 0.0
        %835 = vmatprep.subr.mxu0 0.0
        %836 = vmatpush1.xpose.msra.mxu0 0.0
        %837 = vmatprep.subr.mxu0 0.0
        %838 = vmatpush1.xpose.msra.mxu0 0.0
        %839 = vmatprep.subr.mxu0 0.0
        %840 = vmatpush1.xpose.msra.mxu0 0.0
        %841 = vmatprep.subr.mxu0 0.0
        %842 = vmatpush1.xpose.msra.mxu0 0.0
        %843 = vmatprep.subr.mxu0 0.0
        %844 = vmatpush1.xpose.msra.mxu0 0.0
        %845 = vmatprep.subr.mxu0 0.0
        %846 = vmatpush1.xpose.msra.mxu0 0.0
        %847 = vmatprep.subr.mxu0 0.0
        %848 = vmatpush1.xpose.msra.mxu0 0.0
        %849 = vmatprep.subr.mxu0 0.0
        %850 = vmatpush1.xpose.msra.mxu0 0.0
        %851 = vmatprep.subr.mxu0 0.0
        %852 = vmatpush1.xpose.msra.mxu0 0.0
        %853 = vmatprep.subr.mxu0 0.0
        %854 = vmatpush1.xpose.msra.mxu0 0.0
        %855 = vmatprep.subr.mxu0 0.0
        %856 = vmatpush1.xpose.msra.mxu0 0.0
        %857 = vmatprep.subr.mxu0 0.0
        %858 = vmatpush1.xpose.msra.mxu0 0.0
        %859 = vmatprep.subr.mxu0 0.0
        %860 = vmatpush1.xpose.msra.mxu0 0.0
        %861 = vmatprep.subr.mxu0 0.0
        %862 = vmatpush1.xpose.msra.mxu0 0.0
        %863 = vmatprep.subr.mxu0 0.0
        %864 = vmatpush1.xpose.msra.mxu0 0.0
        %865 = vmatprep.subr.mxu0 0.0
        %866 = vmatpush1.xpose.msra.mxu0 0.0
        %867 = vmatprep.subr.mxu0 0.0
        %868 = vmatpush1.xpose.msra.mxu0 0.0
        %869 = vmatprep.subr.mxu0 0.0
        %870 = vmatpush1.xpose.msra.mxu0 0.0
        %871 = vmatprep.subr.mxu0 0.0
        %872 = vmatpush1.xpose.msra.mxu0 0.0
        %873 = vmatprep.subr.mxu0 0.0
        %874 = vmatpush1.xpose.msra.mxu0 0.0
        %875 = vmatprep.subr.mxu0 0.0
        %876 = vmatpush1.xpose.msra.mxu0 0.0
        %877 = vmatprep.subr.mxu0 0.0
        %878 = vmatpush1.xpose.msra.mxu0 0.0
        %879 = vmatprep.subr.mxu0 0.0
        %880 = vmatpush1.xpose.msra.mxu0 0.0
        %881 = vmatprep.subr.mxu0 0.0
        %882 = vmatpush1.xpose.msra.mxu0 0.0
        %883 = vmatprep.subr.mxu0 0.0
        %884 = vmatpush1.xpose.msra.mxu0 0.0
        %885 = vmatprep.subr.mxu0 0.0
        %886 = vmatpush1.xpose.msra.mxu0 0.0
        %887 = vmatprep.subr.mxu0 0.0
        %888 = vmatpush1.xpose.msra.mxu0 0.0
        %889 = vmatprep.subr.mxu0 0.0
        %890 = vmatpush1.xpose.msra.mxu0 0.0
        %891 = vmatprep.subr.mxu0 0.0
        %892 = vmatpush1.xpose.msra.mxu0 0.0
        %893 = vmatprep.mubr.f32.mxu0 0.0
        %894 = vmatmul.mubr.f32.gmra.mrb[0].mxu0 %v825
        %v895 = vpop.f32.mrb[0].mxu0
        %v896 = vadd.f32 0.0, %v895
        %v897 = vpop.f32.mrb[0].mxu0
        %898 = vdwg.mxu0
        %v899 = vsel %vm659, %v896, -inf
        %900 = vmax.xlane.f32.xlu0 %v899
        %v901 = vpop.xlane.xlu0 %900
        %v902 = vsub.f32 %v896, %v901
        %v903 = vmul.f32 %v902, 1.442695
        %v904 = vpow.pop %v903
        %v905 = vsel %vm659, %v904, 0.0
        %906 = vadd.xlane.f32.xlu0 %v905
        %v907 = vpop.xlane.xlu0 %906
        %v908 = vrcp.pop %v907
        %v909 = vmul.f32 %v904, %v908
        %911 = vrot.lane.b32.xlu0 %v656, 120
        %v912 = vpop.permute.xlu0 %911
        %v915 = vsel %vm659, %v909, 0
        %917 = vmatprep.subr.mxu0 0.0
        %918 = vmatpush1.msra.mxu0 %v912
        %919 = vmatprep.subr.mxu0 0.0
        %920 = vmatpush1.msra.mxu0 0.0
        %921 = vmatprep.subr.mxu0 0.0
        %922 = vmatpush1.msra.mxu0 0.0
        %923 = vmatprep.subr.mxu0 0.0
        %924 = vmatpush1.msra.mxu0 0.0
        %925 = vmatprep.subr.mxu0 0.0
        %926 = vmatpush1.msra.mxu0 0.0
        %927 = vmatprep.subr.mxu0 0.0
        %928 = vmatpush1.msra.mxu0 0.0
        %929 = vmatprep.subr.mxu0 0.0
        %930 = vmatpush1.msra.mxu0 0.0
        %931 = vmatprep.subr.mxu0 0.0
        %932 = vmatpush1.msra.mxu0 0.0
        %933 = vmatprep.subr.mxu0 0.0
        %934 = vmatpush1.msra.mxu0 0.0
        %935 = vmatprep.subr.mxu0 0.0
        %936 = vmatpush1.msra.mxu0 0.0
        %937 = vmatprep.subr.mxu0 0.0
        %938 = vmatpush1.msra.mxu0 0.0
        %939 = vmatprep.subr.mxu0 0.0
        %940 = vmatpush1.msra.mxu0 0.0
        %941 = vmatprep.subr.mxu0 0.0
        %942 = vmatpush1.msra.mxu0 0.0
        %943 = vmatprep.subr.mxu0 0.0
        %944 = vmatpush1.msra.mxu0 0.0
        %945 = vmatprep.subr.mxu0 0.0
        %946 = vmatpush1.msra.mxu0 0.0
        %947 = vmatprep.subr.mxu0 0.0
        %948 = vmatpush1.msra.mxu0 0.0
        %949 = vmatprep.subr.mxu0 0.0
        %950 = vmatpush1.msra.mxu0 0.0
        %951 = vmatprep.subr.mxu0 0.0
        %952 = vmatpush1.msra.mxu0 0.0
        %953 = vmatprep.subr.mxu0 0.0
        %954 = vmatpush1.msra.mxu0 0.0
        %955 = vmatprep.subr.mxu0 0.0
        %956 = vmatpush1.msra.mxu0 0.0
        %957 = vmatprep.subr.mxu0 0.0
        %958 = vmatpush1.msra.mxu0 0.0
        %959 = vmatprep.subr.mxu0 0.0
        %960 = vmatpush1.msra.mxu0 0.0
        %961 = vmatprep.subr.mxu0 0.0
        %962 = vmatpush1.msra.mxu0 0.0
        %963 = vmatprep.subr.mxu0 0.0
        %964 = vmatpush1.msra.mxu0 0.0
        %965 = vmatprep.subr.mxu0 0.0
        %966 = vmatpush1.msra.mxu0 0.0
        %967 = vmatprep.subr.mxu0 0.0
        %968 = vmatpush1.msra.mxu0 0.0
        %969 = vmatprep.subr.mxu0 0.0
        %970 = vmatpush1.msra.mxu0 0.0
        %971 = vmatprep.subr.mxu0 0.0
        %972 = vmatpush1.msra.mxu0 0.0
        %973 = vmatprep.subr.mxu0 0.0
        %974 = vmatpush1.msra.mxu0 0.0
        %975 = vmatprep.subr.mxu0 0.0
        %976 = vmatpush1.msra.mxu0 0.0
        %977 = vmatprep.subr.mxu0 0.0
        %978 = vmatpush1.msra.mxu0 0.0
        %979 = vmatprep.subr.mxu0 0.0
        %980 = vmatpush1.msra.mxu0 0.0
        %981 = vmatprep.mubr.f32.mxu0 0.0
        %982 = vmatmul.mubr.f32.gmra.mrb[0].mxu0 %v915
        %v983 = vpop.f32.mrb[0].mxu0
        %v984 = vadd.f32 0.0, %v983
        %v985 = vpop.f32.mrb[0].mxu0
        %986 = vdwg.mxu0
        %v987 = vld [vmem:[#allocation13 + $0x8] sm:$0xff]
        %v989 = vsel %vm659, %v984, 0
        %991 = vmatprep.subr.mxu0 0.0
        %992 = vmatpush1.msra.mxu0 %v987
        %993 = vmatprep.subr.mxu0 0.0
        %994 = vmatpush1.msra.mxu0 0.0
        %995 = vmatprep.subr.mxu0 0.0
        %996 = vmatpush1.msra.mxu0 0.0
        %997 = vmatprep.subr.mxu0 0.0
        %998 = vmatpush1.msra.mxu0 0.0
        %999 = vmatprep.subr.mxu0 0.0
        %1000 = vmatpush1.msra.mxu0 0.0
        %1001 = vmatprep.subr.mxu0 0.0
        %1002 = vmatpush1.msra.mxu0 0.0
        %1003 = vmatprep.subr.mxu0 0.0
        %1004 = vmatpush1.msra.mxu0 0.0
        %1005 = vmatprep.subr.mxu0 0.0
        %1006 = vmatpush1.msra.mxu0 0.0
        %1007 = vmatprep.subr.mxu0 0.0
        %1008 = vmatpush1.msra.mxu0 0.0
        %1009 = vmatprep.subr.mxu0 0.0
        %1010 = vmatpush1.msra.mxu0 0.0
        %1011 = vmatprep.subr.mxu0 0.0
        %1012 = vmatpush1.msra.mxu0 0.0
        %1013 = vmatprep.subr.mxu0 0.0
        %1014 = vmatpush1.msra.mxu0 0.0
        %1015 = vmatprep.subr.mxu0 0.0
        %1016 = vmatpush1.msra.mxu0 0.0
        %1017 = vmatprep.subr.mxu0 0.0
        %1018 = vmatpush1.msra.mxu0 0.0
        %1019 = vmatprep.subr.mxu0 0.0
        %1020 = vmatpush1.msra.mxu0 0.0
        %1021 = vmatprep.subr.mxu0 0.0
        %1022 = vmatpush1.msra.mxu0 0.0
        %1023 = vmatprep.subr.mxu0 0.0
        %1024 = vmatpush1.msra.mxu0 0.0
        %1025 = vmatprep.subr.mxu0 0.0
        %1026 = vmatpush1.msra.mxu0 0.0
        %1027 = vmatprep.subr.mxu0 0.0
        %1028 = vmatpush1.msra.mxu0 0.0
        %1029 = vmatprep.subr.mxu0 0.0
        %1030 = vmatpush1.msra.mxu0 0.0
        %1031 = vmatprep.subr.mxu0 0.0
        %1032 = vmatpush1.msra.mxu0 0.0
        %1033 = vmatprep.subr.mxu0 0.0
        %1034 = vmatpush1.msra.mxu0 0.0
        %1035 = vmatprep.subr.mxu0 0.0
        %1036 = vmatpush1.msra.mxu0 0.0
        %1037 = vmatprep.subr.mxu0 0.0
        %1038 = vmatpush1.msra.mxu0 0.0
        %1039 = vmatprep.subr.mxu0 0.0
        %1040 = vmatpush1.msra.mxu0 0.0
        %1041 = vmatprep.subr.mxu0 0.0
        %1042 = vmatpush1.msra.mxu0 0.0
        %1043 = vmatprep.subr.mxu0 0.0
        %1044 = vmatpush1.msra.mxu0 0.0
        %1045 = vmatprep.subr.mxu0 0.0
        %1046 = vmatpush1.msra.mxu0 0.0
        %1047 = vmatprep.subr.mxu0 0.0
        %1048 = vmatpush1.msra.mxu0 0.0
        %1049 = vmatprep.subr.mxu0 0.0
        %1050 = vmatpush1.msra.mxu0 0.0
        %1051 = vmatprep.subr.mxu0 0.0
        %1052 = vmatpush1.msra.mxu0 0.0
        %1053 = vmatprep.subr.mxu0 0.0
        %1054 = vmatpush1.msra.mxu0 0.0
        %1055 = vmatprep.mubr.f32.mxu0 0.0
        %1056 = vmatmul.mubr.f32.gmra.mrb[0].mxu0 %v989
        %v1057 = vpop.f32.mrb[0].mxu0
        %v1058 = vadd.f32 0.0, %v1057
        %v1059 = vpop.f32.mrb[0].mxu0
        %1060 = vdwg.mxu0
        %v1062 = vsel %vm659, %v817, 0
        %1064 = vmatprep.subr.mxu0 0.0
        %1065 = vmatpush1.msra.mxu0 %v820
        %1066 = vmatprep.subr.mxu0 0.0
        %1067 = vmatpush1.msra.mxu0 0.0
        %1068 = vmatprep.subr.mxu0 0.0
        %1069 = vmatpush1.msra.mxu0 0.0
        %1070 = vmatprep.subr.mxu0 0.0
        %1071 = vmatpush1.msra.mxu0 0.0
        %1072 = vmatprep.subr.mxu0 0.0
        %1073 = vmatpush1.msra.mxu0 0.0
        %1074 = vmatprep.subr.mxu0 0.0
        %1075 = vmatpush1.msra.mxu0 0.0
        %1076 = vmatprep.subr.mxu0 0.0
        %1077 = vmatpush1.msra.mxu0 0.0
        %1078 = vmatprep.subr.mxu0 0.0
        %1079 = vmatpush1.msra.mxu0 0.0
        %1080 = vmatprep.subr.mxu0 0.0
        %1081 = vmatpush1.msra.mxu0 0.0
        %1082 = vmatprep.subr.mxu0 0.0
        %1083 = vmatpush1.msra.mxu0 0.0
        %1084 = vmatprep.subr.mxu0 0.0
        %1085 = vmatpush1.msra.mxu0 0.0
        %1086 = vmatprep.subr.mxu0 0.0
        %1087 = vmatpush1.msra.mxu0 0.0
        %1088 = vmatprep.subr.mxu0 0.0
        %1089 = vmatpush1.msra.mxu0 0.0
        %1090 = vmatprep.subr.mxu0 0.0
        %1091 = vmatpush1.msra.mxu0 0.0
        %1092 = vmatprep.subr.mxu0 0.0
        %1093 = vmatpush1.msra.mxu0 0.0
        %1094 = vmatprep.subr.mxu0 0.0
        %1095 = vmatpush1.msra.mxu0 0.0
        %1096 = vmatprep.subr.mxu0 0.0
        %1097 = vmatpush1.msra.mxu0 0.0
        %1098 = vmatprep.subr.mxu0 0.0
        %1099 = vmatpush1.msra.mxu0 0.0
        %1100 = vmatprep.subr.mxu0 0.0
        %1101 = vmatpush1.msra.mxu0 0.0
        %1102 = vmatprep.subr.mxu0 0.0
        %1103 = vmatpush1.msra.mxu0 0.0
        %1104 = vmatprep.subr.mxu0 0.0
        %1105 = vmatpush1.msra.mxu0 0.0
        %1106 = vmatprep.subr.mxu0 0.0
        %1107 = vmatpush1.msra.mxu0 0.0
        %1108 = vmatprep.subr.mxu0 0.0
        %1109 = vmatpush1.msra.mxu0 0.0
        %1110 = vmatprep.subr.mxu0 0.0
        %1111 = vmatpush1.msra.mxu0 0.0
        %1112 = vmatprep.subr.mxu0 0.0
        %1113 = vmatpush1.msra.mxu0 0.0
        %1114 = vmatprep.subr.mxu0 0.0
        %1115 = vmatpush1.msra.mxu0 0.0
        %1116 = vmatprep.subr.mxu0 0.0
        %1117 = vmatpush1.msra.mxu0 0.0
        %1118 = vmatprep.subr.mxu0 0.0
        %1119 = vmatpush1.msra.mxu0 0.0
        %1120 = vmatprep.subr.mxu0 0.0
        %1121 = vmatpush1.msra.mxu0 0.0
        %1122 = vmatprep.subr.mxu0 0.0
        %1123 = vmatpush1.msra.mxu0 0.0
        %1124 = vmatprep.subr.mxu0 0.0
        %1125 = vmatpush1.msra.mxu0 0.0
        %1126 = vmatprep.subr.mxu0 0.0
        %1127 = vmatpush1.msra.mxu0 0.0
        %1128 = vmatprep.mubr.f32.mxu0 0.0
        %1129 = vmatmul.mubr.f32.gmra.mrb[0].mxu0 %v1062
        %v1130 = vpop.f32.mrb[0].mxu0
        %v1131 = vadd.f32 %v1058, %v1130
        %v1132 = vpop.f32.mrb[0].mxu0
        %1133 = vdwg.mxu0
        %1134 = vrot.lane.b32.xlu0 %v502, 112
        %v1135 = vpop.permute.xlu0 %1134
        %1136 = vrot.lane.b32.xlu0 %v578, 112
        %v1137 = vpop.permute.xlu0 %1136
        %v1138 = vsel %vm659, %v1135, 0
        %v1140 = vsel %vm659, %v1137, 0
        %1142 = vmatprep.subr.mxu0 0.0
        %1143 = vmatpush1.xpose.msra.mxu0 %v1140
        %1144 = vmatprep.subr.mxu0 0.0
        %1145 = vmatpush1.xpose.msra.mxu0 0.0
        %1146 = vmatprep.subr.mxu0 0.0
        %1147 = vmatpush1.xpose.msra.mxu0 0.0
        %1148 = vmatprep.subr.mxu0 0.0
        %1149 = vmatpush1.xpose.msra.mxu0 0.0
        %1150 = vmatprep.subr.mxu0 0.0
        %1151 = vmatpush1.xpose.msra.mxu0 0.0
        %1152 = vmatprep.subr.mxu0 0.0
        %1153 = vmatpush1.xpose.msra.mxu0 0.0
        %1154 = vmatprep.subr.mxu0 0.0
        %1155 = vmatpush1.xpose.msra.mxu0 0.0
        %1156 = vmatprep.subr.mxu0 0.0
        %1157 = vmatpush1.xpose.msra.mxu0 0.0
        %1158 = vmatprep.subr.mxu0 0.0
        %1159 = vmatpush1.xpose.msra.mxu0 0.0
        %1160 = vmatprep.subr.mxu0 0.0
        %1161 = vmatpush1.xpose.msra.mxu0 0.0
        %1162 = vmatprep.subr.mxu0 0.0
        %1163 = vmatpush1.xpose.msra.mxu0 0.0
        %1164 = vmatprep.subr.mxu0 0.0
        %1165 = vmatpush1.xpose.msra.mxu0 0.0
        %1166 = vmatprep.subr.mxu0 0.0
        %1167 = vmatpush1.xpose.msra.mxu0 0.0
        %1168 = vmatprep.subr.mxu0 0.0
        %1169 = vmatpush1.xpose.msra.mxu0 0.0
        %1170 = vmatprep.subr.mxu0 0.0
        %1171 = vmatpush1.xpose.msra.mxu0 0.0
        %1172 = vmatprep.subr.mxu0 0.0
        %1173 = vmatpush1.xpose.msra.mxu0 0.0
        %1174 = vmatprep.subr.mxu0 0.0
        %1175 = vmatpush1.xpose.msra.mxu0 0.0
        %1176 = vmatprep.subr.mxu0 0.0
        %1177 = vmatpush1.xpose.msra.mxu0 0.0
        %1178 = vmatprep.subr.mxu0 0.0
        %1179 = vmatpush1.xpose.msra.mxu0 0.0
        %1180 = vmatprep.subr.mxu0 0.0
        %1181 = vmatpush1.xpose.msra.mxu0 0.0
        %1182 = vmatprep.subr.mxu0 0.0
        %1183 = vmatpush1.xpose.msra.mxu0 0.0
        %1184 = vmatprep.subr.mxu0 0.0
        %1185 = vmatpush1.xpose.msra.mxu0 0.0
        %1186 = vmatprep.subr.mxu0 0.0
        %1187 = vmatpush1.xpose.msra.mxu0 0.0
        %1188 = vmatprep.subr.mxu0 0.0
        %1189 = vmatpush1.xpose.msra.mxu0 0.0
        %1190 = vmatprep.subr.mxu0 0.0
        %1191 = vmatpush1.xpose.msra.mxu0 0.0
        %1192 = vmatprep.subr.mxu0 0.0
        %1193 = vmatpush1.xpose.msra.mxu0 0.0
        %1194 = vmatprep.subr.mxu0 0.0
        %1195 = vmatpush1.xpose.msra.mxu0 0.0
        %1196 = vmatprep.subr.mxu0 0.0
        %1197 = vmatpush1.xpose.msra.mxu0 0.0
        %1198 = vmatprep.subr.mxu0 0.0
        %1199 = vmatpush1.xpose.msra.mxu0 0.0
        %1200 = vmatprep.subr.mxu0 0.0
        %1201 = vmatpush1.xpose.msra.mxu0 0.0
        %1202 = vmatprep.subr.mxu0 0.0
        %1203 = vmatpush1.xpose.msra.mxu0 0.0
        %1204 = vmatprep.subr.mxu0 0.0
        %1205 = vmatpush1.xpose.msra.mxu0 0.0
        %1206 = vmatprep.mubr.f32.mxu0 0.0
        %1207 = vmatmul.mubr.f32.gmra.mrb[0].mxu0 %v1138
        %v1208 = vpop.f32.mrb[0].mxu0
        %v1209 = vadd.f32 0.0, %v1208
        %v1210 = vpop.f32.mrb[0].mxu0
        %1211 = vdwg.mxu0
        %v1212 = vsel %vm659, %v1209, -inf
        %1213 = vmax.xlane.f32.xlu0 %v1212
        %v1214 = vpop.xlane.xlu0 %1213
        %v1215 = vsub.f32 %v1209, %v1214
        %v1216 = vmul.f32 %v1215, 1.442695
        %v1217 = vpow.pop %v1216
        %v1218 = vsel %vm659, %v1217, 0.0
        %1219 = vadd.xlane.f32.xlu0 %v1218
        %v1220 = vpop.xlane.xlu0 %1219
        %v1221 = vrcp.pop %v1220
        %v1222 = vmul.f32 %v1217, %v1221
        %1223 = vrot.lane.b32.xlu0 %v656, 112
        %v1224 = vpop.permute.xlu0 %1223
        %v1227 = vsel %vm659, %v1222, 0
        %1229 = vmatprep.subr.mxu0 0.0
        %1230 = vmatpush1.msra.mxu0 %v1224
        %1231 = vmatprep.subr.mxu0 0.0
        %1232 = vmatpush1.msra.mxu0 0.0
        %1233 = vmatprep.subr.mxu0 0.0
        %1234 = vmatpush1.msra.mxu0 0.0
        %1235 = vmatprep.subr.mxu0 0.0
        %1236 = vmatpush1.msra.mxu0 0.0
        %1237 = vmatprep.subr.mxu0 0.0
        %1238 = vmatpush1.msra.mxu0 0.0
        %1239 = vmatprep.subr.mxu0 0.0
        %1240 = vmatpush1.msra.mxu0 0.0
        %1241 = vmatprep.subr.mxu0 0.0
        %1242 = vmatpush1.msra.mxu0 0.0
        %1243 = vmatprep.subr.mxu0 0.0
        %1244 = vmatpush1.msra.mxu0 0.0
        %1245 = vmatprep.subr.mxu0 0.0
        %1246 = vmatpush1.msra.mxu0 0.0
        %1247 = vmatprep.subr.mxu0 0.0
        %1248 = vmatpush1.msra.mxu0 0.0
        %1249 = vmatprep.subr.mxu0 0.0
        %1250 = vmatpush1.msra.mxu0 0.0
        %1251 = vmatprep.subr.mxu0 0.0
        %1252 = vmatpush1.msra.mxu0 0.0
        %1253 = vmatprep.subr.mxu0 0.0
        %1254 = vmatpush1.msra.mxu0 0.0
        %1255 = vmatprep.subr.mxu0 0.0
        %1256 = vmatpush1.msra.mxu0 0.0
        %1257 = vmatprep.subr.mxu0 0.0
        %1258 = vmatpush1.msra.mxu0 0.0
        %1259 = vmatprep.subr.mxu0 0.0
        %1260 = vmatpush1.msra.mxu0 0.0
        %1261 = vmatprep.subr.mxu0 0.0
        %1262 = vmatpush1.msra.mxu0 0.0
        %1263 = vmatprep.subr.mxu0 0.0
        %1264 = vmatpush1.msra.mxu0 0.0
        %1265 = vmatprep.subr.mxu0 0.0
        %1266 = vmatpush1.msra.mxu0 0.0
        %1267 = vmatprep.subr.mxu0 0.0
        %1268 = vmatpush1.msra.mxu0 0.0
        %1269 = vmatprep.subr.mxu0 0.0
        %1270 = vmatpush1.msra.mxu0 0.0
        %1271 = vmatprep.subr.mxu0 0.0
        %1272 = vmatpush1.msra.mxu0 0.0
        %1273 = vmatprep.subr.mxu0 0.0
        %1274 = vmatpush1.msra.mxu0 0.0
        %1275 = vmatprep.subr.mxu0 0.0
        %1276 = vmatpush1.msra.mxu0 0.0
        %1277 = vmatprep.subr.mxu0 0.0
        %1278 = vmatpush1.msra.mxu0 0.0
        %1279 = vmatprep.subr.mxu0 0.0
        %1280 = vmatpush1.msra.mxu0 0.0
        %1281 = vmatprep.subr.mxu0 0.0
        %1282 = vmatpush1.msra.mxu0 0.0
        %1283 = vmatprep.subr.mxu0 0.0
        %1284 = vmatpush1.msra.mxu0 0.0
        %1285 = vmatprep.subr.mxu0 0.0
        %1286 = vmatpush1.msra.mxu0 0.0
        %1287 = vmatprep.subr.mxu0 0.0
        %1288 = vmatpush1.msra.mxu0 0.0
        %1289 = vmatprep.subr.mxu0 0.0
        %1290 = vmatpush1.msra.mxu0 0.0
        %1291 = vmatprep.subr.mxu0 0.0
        %1292 = vmatpush1.msra.mxu0 0.0
        %1293 = vmatprep.mubr.f32.mxu0 0.0
        %1294 = vmatmul.mubr.f32.gmra.mrb[0].mxu0 %v1227
        %v1295 = vpop.f32.mrb[0].mxu0
        %v1296 = vadd.f32 0.0, %v1295
        %v1297 = vpop.f32.mrb[0].mxu0
        %1298 = vdwg.mxu0
        %v1299 = vld [vmem:[#allocation13 + $0x10] sm:$0xff]
        %v1301 = vsel %vm659, %v1296, 0
        %1303 = vmatprep.subr.mxu0 0.0
        %1304 = vmatpush1.msra.mxu0 %v1299
        %1305 = vmatprep.subr.mxu0 0.0
        %1306 = vmatpush1.msra.mxu0 0.0
        %1307 = vmatprep.subr.mxu0 0.0
        %1308 = vmatpush1.msra.mxu0 0.0
        %1309 = vmatprep.subr.mxu0 0.0
        %1310 = vmatpush1.msra.mxu0 0.0
        %1311 = vmatprep.subr.mxu0 0.0
        %1312 = vmatpush1.msra.mxu0 0.0
        %1313 = vmatprep.subr.mxu0 0.0
        %1314 = vmatpush1.msra.mxu0 0.0
        %1315 = vmatprep.subr.mxu0 0.0
        %1316 = vmatpush1.msra.mxu0 0.0
        %1317 = vmatprep.subr.mxu0 0.0
        %1318 = vmatpush1.msra.mxu0 0.0
        %1319 = vmatprep.subr.mxu0 0.0
        %1320 = vmatpush1.msra.mxu0 0.0
        %1321 = vmatprep.subr.mxu0 0.0
        %1322 = vmatpush1.msra.mxu0 0.0
        %1323 = vmatprep.subr.mxu0 0.0
        %1324 = vmatpush1.msra.mxu0 0.0
        %1325 = vmatprep.subr.mxu0 0.0
        %1326 = vmatpush1.msra.mxu0 0.0
        %1327 = vmatprep.subr.mxu0 0.0
        %1328 = vmatpush1.msra.mxu0 0.0
        %1329 = vmatprep.subr.mxu0 0.0
        %1330 = vmatpush1.msra.mxu0 0.0
        %1331 = vmatprep.subr.mxu0 0.0
        %1332 = vmatpush1.msra.mxu0 0.0
        %1333 = vmatprep.subr.mxu0 0.0
        %1334 = vmatpush1.msra.mxu0 0.0
        %1335 = vmatprep.subr.mxu0 0.0
        %1336 = vmatpush1.msra.mxu0 0.0
        %1337 = vmatprep.subr.mxu0 0.0
        %1338 = vmatpush1.msra.mxu0 0.0
        %1339 = vmatprep.subr.mxu0 0.0
        %1340 = vmatpush1.msra.mxu0 0.0
        %1341 = vmatprep.subr.mxu0 0.0
        %1342 = vmatpush1.msra.mxu0 0.0
        %1343 = vmatprep.subr.mxu0 0.0
        %1344 = vmatpush1.msra.mxu0 0.0
        %1345 = vmatprep.subr.mxu0 0.0
        %1346 = vmatpush1.msra.mxu0 0.0
        %1347 = vmatprep.subr.mxu0 0.0
        %1348 = vmatpush1.msra.mxu0 0.0
        %1349 = vmatprep.subr.mxu0 0.0
        %1350 = vmatpush1.msra.mxu0 0.0
        %1351 = vmatprep.subr.mxu0 0.0
        %1352 = vmatpush1.msra.mxu0 0.0
        %1353 = vmatprep.subr.mxu0 0.0
        %1354 = vmatpush1.msra.mxu0 0.0
        %1355 = vmatprep.subr.mxu0 0.0
        %1356 = vmatpush1.msra.mxu0 0.0
        %1357 = vmatprep.subr.mxu0 0.0
        %1358 = vmatpush1.msra.mxu0 0.0
        %1359 = vmatprep.subr.mxu0 0.0
        %1360 = vmatpush1.msra.mxu0 0.0
        %1361 = vmatprep.subr.mxu0 0.0
        %1362 = vmatpush1.msra.mxu0 0.0
        %1363 = vmatprep.subr.mxu0 0.0
        %1364 = vmatpush1.msra.mxu0 0.0
        %1365 = vmatprep.subr.mxu0 0.0
        %1366 = vmatpush1.msra.mxu0 0.0
        %1367 = vmatprep.mubr.f32.mxu0 0.0
        %1368 = vmatmul.mubr.f32.gmra.mrb[0].mxu0 %v1301
        %v1369 = vpop.f32.mrb[0].mxu0
        %v1370 = vadd.f32 0.0, %v1369
        %v1371 = vpop.f32.mrb[0].mxu0
        %1372 = vdwg.mxu0
        %v1373 = vadd.f32 %v1131, %v1370
        %1374 = vrot.lane.b32.xlu0 %v502, 104
        %v1375 = vpop.permute.xlu0 %1374
        %1376 = vrot.lane.b32.xlu0 %v578, 104
        %v1377 = vpop.permute.xlu0 %1376
        %v1378 = vsel %vm659, %v1375, 0
        %v1380 = vsel %vm659, %v1377, 0
        %1382 = vmatprep.subr.mxu0 0.0
        %1383 = vmatpush1.xpose.msra.mxu0 %v1380
        %1384 = vmatprep.subr.mxu0 0.0
        %1385 = vmatpush1.xpose.msra.mxu0 0.0
        %1386 = vmatprep.subr.mxu0 0.0
        %1387 = vmatpush1.xpose.msra.mxu0 0.0
        %1388 = vmatprep.subr.mxu0 0.0
        %1389 = vmatpush1.xpose.msra.mxu0 0.0
        %1390 = vmatprep.subr.mxu0 0.0
        %1391 = vmatpush1.xpose.msra.mxu0 0.0
        %1392 = vmatprep.subr.mxu0 0.0
        %1393 = vmatpush1.xpose.msra.mxu0 0.0
        %1394 = vmatprep.subr.mxu0 0.0
        %1395 = vmatpush1.xpose.msra.mxu0 0.0
        %1396 = vmatprep.subr.mxu0 0.0
        %1397 = vmatpush1.xpose.msra.mxu0 0.0
        %1398 = vmatprep.subr.mxu0 0.0
        %1399 = vmatpush1.xpose.msra.mxu0 0.0
        %1400 = vmatprep.subr.mxu0 0.0
        %1401 = vmatpush1.xpose.msra.mxu0 0.0
        %1402 = vmatprep.subr.mxu0 0.0
        %1403 = vmatpush1.xpose.msra.mxu0 0.0
        %1404 = vmatprep.subr.mxu0 0.0
        %1405 = vmatpush1.xpose.msra.mxu0 0.0
        %1406 = vmatprep.subr.mxu0 0.0
        %1407 = vmatpush1.xpose.msra.mxu0 0.0
        %1408 = vmatprep.subr.mxu0 0.0
        %1409 = vmatpush1.xpose.msra.mxu0 0.0
        %1410 = vmatprep.subr.mxu0 0.0
        %1411 = vmatpush1.xpose.msra.mxu0 0.0
        %1412 = vmatprep.subr.mxu0 0.0
        %1413 = vmatpush1.xpose.msra.mxu0 0.0
        %1414 = vmatprep.subr.mxu0 0.0
        %1415 = vmatpush1.xpose.msra.mxu0 0.0
        %1416 = vmatprep.subr.mxu0 0.0
        %1417 = vmatpush1.xpose.msra.mxu0 0.0
        %1418 = vmatprep.subr.mxu0 0.0
        %1419 = vmatpush1.xpose.msra.mxu0 0.0
        %1420 = vmatprep.subr.mxu0 0.0
        %1421 = vmatpush1.xpose.msra.mxu0 0.0
        %1422 = vmatprep.subr.mxu0 0.0
        %1423 = vmatpush1.xpose.msra.mxu0 0.0
        %1424 = vmatprep.subr.mxu0 0.0
        %1425 = vmatpush1.xpose.msra.mxu0 0.0
        %1426 = vmatprep.subr.mxu0 0.0
        %1427 = vmatpush1.xpose.msra.mxu0 0.0
        %1428 = vmatprep.subr.mxu0 0.0
        %1429 = vmatpush1.xpose.msra.mxu0 0.0
        %1430 = vmatprep.subr.mxu0 0.0
        %1431 = vmatpush1.xpose.msra.mxu0 0.0
        %1432 = vmatprep.subr.mxu0 0.0
        %1433 = vmatpush1.xpose.msra.mxu0 0.0
        %1434 = vmatprep.subr.mxu0 0.0
        %1435 = vmatpush1.xpose.msra.mxu0 0.0
        %1436 = vmatprep.subr.mxu0 0.0
        %1437 = vmatpush1.xpose.msra.mxu0 0.0
        %1438 = vmatprep.subr.mxu0 0.0
        %1439 = vmatpush1.xpose.msra.mxu0 0.0
        %1440 = vmatprep.subr.mxu0 0.0
        %1441 = vmatpush1.xpose.msra.mxu0 0.0
        %1442 = vmatprep.subr.mxu0 0.0
        %1443 = vmatpush1.xpose.msra.mxu0 0.0
        %1444 = vmatprep.subr.mxu0 0.0
        %1445 = vmatpush1.xpose.msra.mxu0 0.0
        %1446 = vmatprep.mubr.f32.mxu0 0.0
        %1447 = vmatmul.mubr.f32.gmra.mrb[0].mxu0 %v1378
        %v1448 = vpop.f32.mrb[0].mxu0
        %v1449 = vadd.f32 0.0, %v1448
        %v1450 = vpop.f32.mrb[0].mxu0
        %1451 = vdwg.mxu0
        %v1452 = vsel %vm659, %v1449, -inf
        %1453 = vmax.xlane.f32.xlu0 %v1452
        %v1454 = vpop.xlane.xlu0 %1453
        %v1455 = vsub.f32 %v1449, %v1454
        %v1456 = vmul.f32 %v1455, 1.442695
        %v1457 = vpow.pop %v1456
        %v1458 = vsel %vm659, %v1457, 0.0
        %1459 = vadd.xlane.f32.xlu0 %v1458
        %v1460 = vpop.xlane.xlu0 %1459
        %v1461 = vrcp.pop %v1460
        %v1462 = vmul.f32 %v1457, %v1461
        %1463 = vrot.lane.b32.xlu0 %v656, 104
        %v1464 = vpop.permute.xlu0 %1463
        %v1467 = vsel %vm659, %v1462, 0
        %1469 = vmatprep.subr.mxu0 0.0
        %1470 = vmatpush1.msra.mxu0 %v1464
        %1471 = vmatprep.subr.mxu0 0.0
        %1472 = vmatpush1.msra.mxu0 0.0
        %1473 = vmatprep.subr.mxu0 0.0
        %1474 = vmatpush1.msra.mxu0 0.0
        %1475 = vmatprep.subr.mxu0 0.0
        %1476 = vmatpush1.msra.mxu0 0.0
        %1477 = vmatprep.subr.mxu0 0.0
        %1478 = vmatpush1.msra.mxu0 0.0
        %1479 = vmatprep.subr.mxu0 0.0
        %1480 = vmatpush1.msra.mxu0 0.0
        %1481 = vmatprep.subr.mxu0 0.0
        %1482 = vmatpush1.msra.mxu0 0.0
        %1483 = vmatprep.subr.mxu0 0.0
        %1484 = vmatpush1.msra.mxu0 0.0
        %1485 = vmatprep.subr.mxu0 0.0
        %1486 = vmatpush1.msra.mxu0 0.0
        %1487 = vmatprep.subr.mxu0 0.0
        %1488 = vmatpush1.msra.mxu0 0.0
        %1489 = vmatprep.subr.mxu0 0.0
        %1490 = vmatpush1.msra.mxu0 0.0
        %1491 = vmatprep.subr.mxu0 0.0
        %1492 = vmatpush1.msra.mxu0 0.0
        %1493 = vmatprep.subr.mxu0 0.0
        %1494 = vmatpush1.msra.mxu0 0.0
        %1495 = vmatprep.subr.mxu0 0.0
        %1496 = vmatpush1.msra.mxu0 0.0
        %1497 = vmatprep.subr.mxu0 0.0
        %1498 = vmatpush1.msra.mxu0 0.0
        %1499 = vmatprep.subr.mxu0 0.0
        %1500 = vmatpush1.msra.mxu0 0.0
        %1501 = vmatprep.subr.mxu0 0.0
        %1502 = vmatpush1.msra.mxu0 0.0
        %1503 = vmatprep.subr.mxu0 0.0
        %1504 = vmatpush1.msra.mxu0 0.0
        %1505 = vmatprep.subr.mxu0 0.0
        %1506 = vmatpush1.msra.mxu0 0.0
        %1507 = vmatprep.subr.mxu0 0.0
        %1508 = vmatpush1.msra.mxu0 0.0
        %1509 = vmatprep.subr.mxu0 0.0
        %1510 = vmatpush1.msra.mxu0 0.0
        %1511 = vmatprep.subr.mxu0 0.0
        %1512 = vmatpush1.msra.mxu0 0.0
        %1513 = vmatprep.subr.mxu0 0.0
        %1514 = vmatpush1.msra.mxu0 0.0
        %1515 = vmatprep.subr.mxu0 0.0
        %1516 = vmatpush1.msra.mxu0 0.0
        %1517 = vmatprep.subr.mxu0 0.0
        %1518 = vmatpush1.msra.mxu0 0.0
        %1519 = vmatprep.subr.mxu0 0.0
        %1520 = vmatpush1.msra.mxu0 0.0
        %1521 = vmatprep.subr.mxu0 0.0
        %1522 = vmatpush1.msra.mxu0 0.0
        %1523 = vmatprep.subr.mxu0 0.0
        %1524 = vmatpush1.msra.mxu0 0.0
        %1525 = vmatprep.subr.mxu0 0.0
        %1526 = vmatpush1.msra.mxu0 0.0
        %1527 = vmatprep.subr.mxu0 0.0
        %1528 = vmatpush1.msra.mxu0 0.0
        %1529 = vmatprep.subr.mxu0 0.0
        %1530 = vmatpush1.msra.mxu0 0.0
        %1531 = vmatprep.subr.mxu0 0.0
        %1532 = vmatpush1.msra.mxu0 0.0
        %1533 = vmatprep.mubr.f32.mxu0 0.0
        %1534 = vmatmul.mubr.f32.gmra.mrb[0].mxu0 %v1467
        %v1535 = vpop.f32.mrb[0].mxu0
        %v1536 = vadd.f32 0.0, %v1535
        %v1537 = vpop.f32.mrb[0].mxu0
        %1538 = vdwg.mxu0
        %v1539 = vld [vmem:[#allocation13 + $0x18] sm:$0xff]
        %v1541 = vsel %vm659, %v1536, 0
        %1543 = vmatprep.subr.mxu0 0.0
        %1544 = vmatpush1.msra.mxu0 %v1539
        %1545 = vmatprep.subr.mxu0 0.0
        %1546 = vmatpush1.msra.mxu0 0.0
        %1547 = vmatprep.subr.mxu0 0.0
        %1548 = vmatpush1.msra.mxu0 0.0
        %1549 = vmatprep.subr.mxu0 0.0
        %1550 = vmatpush1.msra.mxu0 0.0
        %1551 = vmatprep.subr.mxu0 0.0
        %1552 = vmatpush1.msra.mxu0 0.0
        %1553 = vmatprep.subr.mxu0 0.0
        %1554 = vmatpush1.msra.mxu0 0.0
        %1555 = vmatprep.subr.mxu0 0.0
        %1556 = vmatpush1.msra.mxu0 0.0
        %1557 = vmatprep.subr.mxu0 0.0
        %1558 = vmatpush1.msra.mxu0 0.0
        %1559 = vmatprep.subr.mxu0 0.0
        %1560 = vmatpush1.msra.mxu0 0.0
        %1561 = vmatprep.subr.mxu0 0.0
        %1562 = vmatpush1.msra.mxu0 0.0
        %1563 = vmatprep.subr.mxu0 0.0
        %1564 = vmatpush1.msra.mxu0 0.0
        %1565 = vmatprep.subr.mxu0 0.0
        %1566 = vmatpush1.msra.mxu0 0.0
        %1567 = vmatprep.subr.mxu0 0.0
        %1568 = vmatpush1.msra.mxu0 0.0
        %1569 = vmatprep.subr.mxu0 0.0
        %1570 = vmatpush1.msra.mxu0 0.0
        %1571 = vmatprep.subr.mxu0 0.0
        %1572 = vmatpush1.msra.mxu0 0.0
        %1573 = vmatprep.subr.mxu0 0.0
        %1574 = vmatpush1.msra.mxu0 0.0
        %1575 = vmatprep.subr.mxu0 0.0
        %1576 = vmatpush1.msra.mxu0 0.0
        %1577 = vmatprep.subr.mxu0 0.0
        %1578 = vmatpush1.msra.mxu0 0.0
        %1579 = vmatprep.subr.mxu0 0.0
        %1580 = vmatpush1.msra.mxu0 0.0
        %1581 = vmatprep.subr.mxu0 0.0
        %1582 = vmatpush1.msra.mxu0 0.0
        %1583 = vmatprep.subr.mxu0 0.0
        %1584 = vmatpush1.msra.mxu0 0.0
        %1585 = vmatprep.subr.mxu0 0.0
        %1586 = vmatpush1.msra.mxu0 0.0
        %1587 = vmatprep.subr.mxu0 0.0
        %1588 = vmatpush1.msra.mxu0 0.0
        %1589 = vmatprep.subr.mxu0 0.0
        %1590 = vmatpush1.msra.mxu0 0.0
        %1591 = vmatprep.subr.mxu0 0.0
        %1592 = vmatpush1.msra.mxu0 0.0
        %1593 = vmatprep.subr.mxu0 0.0
        %1594 = vmatpush1.msra.mxu0 0.0
        %1595 = vmatprep.subr.mxu0 0.0
        %1596 = vmatpush1.msra.mxu0 0.0
        %1597 = vmatprep.subr.mxu0 0.0
        %1598 = vmatpush1.msra.mxu0 0.0
        %1599 = vmatprep.subr.mxu0 0.0
        %1600 = vmatpush1.msra.mxu0 0.0
        %1601 = vmatprep.subr.mxu0 0.0
        %1602 = vmatpush1.msra.mxu0 0.0
        %1603 = vmatprep.subr.mxu0 0.0
        %1604 = vmatpush1.msra.mxu0 0.0
        %1605 = vmatprep.subr.mxu0 0.0
        %1606 = vmatpush1.msra.mxu0 0.0
        %1607 = vmatprep.mubr.f32.mxu0 0.0
        %1608 = vmatmul.mubr.f32.gmra.mrb[0].mxu0 %v1541
        %v1609 = vpop.f32.mrb[0].mxu0
        %v1610 = vadd.f32 0.0, %v1609
        %v1611 = vpop.f32.mrb[0].mxu0
        %1612 = vdwg.mxu0
        %v1613 = vadd.f32 %v1373, %v1610
        %1614 = vst [vmem:[%s422] sm:$0xff] %v1613
        %s1615 = sand.u32 %s199, 1
        %s1616 = scalar_lea.sflag [#allocation4], %s1615
        %s1617 = sand.u32 %s199, 1
        %s1618 = smul.addr %s1617, 8
        %s1619 = scalar_lea.vmem [#allocation14], %s1618
        // Predicated region
        $region77: #{tpu_custom_call.1} parent=47 // pred_check
          %p1620 = pneg %p209
        $region78: #{tpu_custom_call.1} parent=47 // pred_check_branch
          %1622 = sbr.rel (%p1620) target = $region80
        $region79: #{tpu_custom_call.1} parent=47 // pred_region
          %s1624 = ssub.s32 128, 128
          %1625 = vsyncadd %s1616, %s1624
          %s1626 = smul.addr %s29, 128
          %s1627 = scalar_lea.hbm %s7, %s1626
          %s1629 = sshll.u32 %s1619, 4
          %s1630 = int_to_ptr.vmem [resolvable:$true] %s1629
          %1632 = dma.vmem_to_hbm [thread:$0]  %s1630, 128, %s1627, %s1616
        $region80: #{tpu_custom_call.1} parent=47 // pred_fallthru
          _
      $region48: #{tpu_custom_call.1} parent=5 // pred_fallthru
        _
      %p1633 = scmp.le.s32.totalorder 2, %s24
      // Predicated region
      $region81: #{tpu_custom_call.1} parent=5 // pred_check
        %p1634 = pneg %p1633
      $region82: #{tpu_custom_call.1} parent=5 // pred_check_branch
        %1636 = sbr.rel (%p1634) target = $region84
      $region83: #{tpu_custom_call.1} parent=5 // pred_region
        %s1637 = ssub.s32 %s24, 2
        // Predicated region
        $region85: #{tpu_custom_call.1} parent=83 // pred_check
          %p1638 = pneg %p215
        $region86: #{tpu_custom_call.1} parent=83 // pred_check_branch
          %1640 = sbr.rel (%p1638) target = $region88
        $region87: #{tpu_custom_call.1} parent=83 // pred_region
          %s1641 = sand.u32 %s200, 1
          %s1642 = scalar_lea.sflag [#allocation4], %s1641
          %s1643 = sand.u32 %s200, 1
          %s1644 = smul.addr %s1643, 8
          %s1645 = scalar_lea.vmem [#allocation14], %s1644
          %1646 = dma.done %s1642, 128
        $region88: #{tpu_custom_call.1} parent=83 // pred_fallthru
          _
      $region84: #{tpu_custom_call.1} parent=5 // pred_fallthru
        _
    $region6: #{tpu_custom_call.1} parent=1 // loop_footer
      %s28 = sadd.s32 1, %s24
    $region7: #{tpu_custom_call.1} parent=1 // loop_footer_branch
      %23 = sbr.rel target = $region3
    $region8: #{tpu_custom_call.1} parent=1 // loop_exit
      _
    %1647 = vsyncpa [#allocation3], 1
    %s1648 = scalar_lea.sflag [#allocation3], 1
    %1649 = vsyncpa %s1648, 1
    %1650 = vsyncpa [#allocation6], 1
    %s1651 = scalar_lea.sflag [#allocation6], 1
    %1652 = vsyncpa %s1651, 1
    %1653 = vsyncpa [#allocation9], 1
    %1654 = vsyncpa [#allocation12], 1
    %1655 = vsyncpa [#allocation4], 1
    %s1656 = scalar_lea.sflag [#allocation4], 1
    %1657 = vsyncpa %s1656, 1

</llo_original>
